<compile_context>
chip_gen: v7x
topology: tpu7x:2x2x1
jax: 0.10.0
libtpu: 0.0.40
codegen_flags: <defaults>
</compile_context>

<pallas_src>
import functools
import math
from functools import partial

import numpy as np

import jax
import jax.numpy as jnp
from jax import lax
from jax.experimental import pallas as pl
from jax.experimental.pallas import tpu as pltpu


# -----------------------------------------------------------------------------
# Generation-aware VMEM budget.
# -----------------------------------------------------------------------------
@functools.lru_cache(maxsize=None)
def _vmem_limit_bytes():
    cap = None
    try:
        info_fn = getattr(pltpu, "get_tpu_info", None)
        if info_fn is not None:
            cap = int(getattr(info_fn(), "vmem_capacity_bytes", 0)) or None
    except Exception:
        cap = None
    if cap is None:
        cap = 64 * 1024 * 1024  # conservative default: v7x per-core VMEM
    # v5e/v6e (128 MiB) -> 96 MiB scoped limit; v7x (64 MiB) -> 48 MiB.
    return min((cap * 3) // 4, 96 * 1024 * 1024)


# -----------------------------------------------------------------------------
# Kernel 1: scaled-dot-product spatial attention with the value-embedding
# already folded into V'.
#   scores[n, i, j] = sum_c k[n, c, i] * q[n, c, j] / sqrt(Ckq)
#   p_attn = softmax(scores, axis over i)
#   out[n, :, j] = V'[n] @ p_attn[:, j]          with V' = Wv @ V
# Grid: (batch, query tiles, key tiles); online softmax over the key axis with
# m/l/acc scratch (exact when the key axis fits in one tile, which the tile
# chooser prefers).
# -----------------------------------------------------------------------------
def _attention_kernel(kt_ref, q_ref, v_ref, o_ref, m_ref, l_ref, acc_ref, *, scale):
    kk = pl.program_id(2)

    @pl.when(kk == 0)
    def _():
        m_ref[...] = jnp.full(m_ref.shape, -jnp.inf, jnp.float32)
        l_ref[...] = jnp.zeros(l_ref.shape, jnp.float32)
        acc_ref[...] = jnp.zeros(acc_ref.shape, jnp.float32)

    # Scale the small (Ckq, TQ) Q tile (fp32 in HBM -> bf16 here), not the
    # (TK, TQ) scores block.
    q = (q_ref[0] * scale).astype(jnp.bfloat16)                 # (Ckq, TQ)
    kt = kt_ref[0]                                              # (TK, Ckq) bf16
    s = jnp.dot(kt, q, preferred_element_type=jnp.float32)      # (TK, TQ) f32

    m_prev = m_ref[...]                                         # (1, TQ)
    m_new = jnp.maximum(m_prev, jnp.max(s, axis=0, keepdims=True))
    alpha = jnp.exp(m_prev - m_new)                             # (1, TQ)
    p = jnp.exp(s - m_new)                                      # (TK, TQ) f32
    l_ref[...] = alpha * l_ref[...] + jnp.sum(p, axis=0, keepdims=True)
    pv = jnp.dot(v_ref[0], p.astype(jnp.bfloat16),
                 preferred_element_type=jnp.float32)            # (C, TQ)
    acc_ref[...] = alpha * acc_ref[...] + pv
    m_ref[...] = m_new

    @pl.when(kk == pl.num_programs(2) - 1)
    def _():
        inv = pl.reciprocal(l_ref[...], approx=True)
        o_ref[0] = (acc_ref[...] * inv).astype(o_ref.dtype)


def _attn_tiles(hw, ckq, c, vmem_limit):
    """Pick (key_tile, query_tile).  Tiles are either the full HW axis or
    128-aligned divisors of it (lane/sublane layout rules); prefer fully
    resident keys, and check everything against the VMEM budget."""
    budget = max(vmem_limit // 2, 4 * 1024 * 1024)

    def est(tk, tq):
        return (2 * tk * ckq * 2 * 2      # K^T tile, bf16, double-buffered
                + 2 * ckq * tq * 4        # Q tile, fp32 (cast in-kernel)
                + 2 * c * tk * 2          # V' tile, bf16
                + 2 * c * tq * 2          # out tile, bf16
                + 4 * (2 + c) * tq        # m / l / acc scratch, fp32
                + 12 * tk * tq)           # fp32 scores / exp temporaries

    if est(hw, hw) <= budget:             # fully resident: exact one-pass softmax
        return hw, hw

    divs = [t for t in range((hw // 128) * 128, 0, -128) if hw % t == 0]
    options = [hw] + divs
    tq_options = [t for t in options if t <= 1024] or options[-1:]
    for tq in tq_options:
        for tk in options:                # largest key tile first (fewest passes)
            if est(tk, tq) <= budget:
                return tk, tq
    raise NotImplementedError(
        f"spatial_attention: H*W={hw} cannot be tiled within the VMEM budget "
        f"({vmem_limit} bytes); pad H*W to a multiple of 128.")


def spatial_attention(k, q, v, wv, *, out_dtype=jnp.bfloat16):
    """k, q: (N, Ckq, H, W); v: (N, C, H, W); wv: (C, C) 1x1 value-embed conv."""
    n, ckq, h, w = k.shape
    c = v.shape[1]
    hw = h * w
    vmem_limit = _vmem_limit_bytes()
    tk, tq = _attn_tiles(hw, ckq, c, vmem_limit)
    nk, nq = hw // tk, hw // tq
    scale = 1.0 / math.sqrt(ckq)

    # One-time layout plumbing (XLA): transpose+cast K; fold Wv into V once.
    kt = jnp.swapaxes(k.reshape(n, ckq, hw), 1, 2).astype(jnp.bfloat16)   # (N, HW, Ckq)
    qf = q.reshape(n, ckq, hw)                                            # fp32; cast in-kernel
    vf = jnp.einsum("oc,ncl->nol", wv, v.reshape(n, c, hw)).astype(jnp.bfloat16)

    out = pl.pallas_call(
        partial(_attention_kernel, scale=scale),
        out_shape=jax.ShapeDtypeStruct((n, c, hw), out_dtype),
        grid=(n, nq, nk),
        in_specs=[
            pl.BlockSpec((1, tk, ckq), lambda b, j, kk: (b, kk, 0)),   # K^T tile
            pl.BlockSpec((1, ckq, tq), lambda b, j, kk: (b, 0, j)),    # Q tile (resident over kk)
            pl.BlockSpec((1, c, tk), lambda b, j, kk: (b, 0, kk)),     # V' tile
        ],
        out_specs=pl.BlockSpec((1, c, tq), lambda b, j, kk: (b, 0, j)),
        scratch_shapes=[
            pltpu.VMEM((1, tq), jnp.float32),   # running max
            pltpu.VMEM((1, tq), jnp.float32),   # running denom
            pltpu.VMEM((c, tq), jnp.float32),   # running numerator
        ],
        compiler_params=pltpu.CompilerParams(
            dimension_semantics=("parallel", "arbitrary", "arbitrary"),
            vmem_limit_bytes=vmem_limit),
    )(kt, qf, vf)
    return out.reshape(n, c, h, w)


# -----------------------------------------------------------------------------
# Kernel 2: 3x3 conv (optionally dilated), fused LeakyReLU(0.2) and optional
# residual, row-tiled.  Two BlockSpec views of the same flattened padded input
# (row block r and row block r+1) supply the 2d halo rows, so all tap slices
# are static.  The 9 taps are written in place into a persistent VMEM slab and
# the whole conv is one (Cout, 9*Cin) x (9*Cin, TH*Wq) MXU matmul.  Columns
# [W, Wq) are junk from the width padding and are cropped by the wrapper.
# -----------------------------------------------------------------------------
def _conv3x3_kernel(xa_ref, xb_ref, w_ref, *rest,
                    slope, add_residual, tap_starts, slab_len):
    if add_residual:
        res_ref, o_ref, slab_ref = rest
    else:
        o_ref, slab_ref = rest
    cin = xa_ref.shape[1]

    # Build the im2col slab directly into the scratch (no concatenate temp).
    for t, s in enumerate(tap_starts):
        r0, r1 = t * cin, (t + 1) * cin
        if s == 0:
            slab_ref[r0:r1, :] = xa_ref[0]
        else:
            slab_ref[r0:r1, : slab_len - s] = xa_ref[0, :, s:]
            slab_ref[r0:r1, slab_len - s:] = xb_ref[0, :, :s]

    acc = jnp.dot(w_ref[...], slab_ref[...],
                  preferred_element_type=jnp.float32)           # (Cout, TH*Wq)
    y = jnp.where(acc > 0.0, acc, slope * acc)                  # LeakyReLU, fp32
    if add_residual:
        y = y + res_ref[0]
    o_ref[0] = y.astype(o_ref.dtype)


def _conv_tiling(h, w, cin, cout, d, has_res, out_itemsize, vmem_limit):
    """Choose (row_tile TH, padded width Wq): TH divides H, TH*Wq is a multiple
    of 128 (lane-dense blocks), the 2d-row halo fits in one row block, and the
    per-step VMEM estimate fits the budget."""
    wp = w + 2 * d
    budget = max(vmem_limit // 2, 4 * 1024 * 1024)

    def padded_width(th):
        q = 128 // math.gcd(th, 128)
        return ((wp + q - 1) // q) * q

    def est(th, wq):
        sl = th * wq
        return (4 * cin * sl * 2            # two input streams, bf16, double-buffered
                + 2 * cout * 9 * cin * 2    # weights
                + (2 * cout * sl * 4 if has_res else 0)
                + 2 * cout * sl * out_itemsize
                + 9 * cin * sl * 2          # im2col slab scratch
                + 2 * cout * sl * 4)        # fp32 acc + activation temp

    min_th = 2 * d + 1                      # halo (2d rows) must fit in one block
    if h < min_th:
        raise NotImplementedError(f"conv3x3: height {h} too small for dilation {d}")
    divisors = [t for t in range(h, min_th - 1, -1) if h % t == 0]
    for th in divisors:
        wq = padded_width(th)
        if est(th, wq) <= budget:
            return th, wq
    th = divisors[-1]
    return th, padded_width(th)             # best effort on extreme shapes


def conv3x3_lrelu(x, w, *, dilation=1, residual=None, slope=0.2,
                  out_dtype=jnp.float32):
    """'same' 3x3 conv (padding == dilation), no bias, fused LeakyReLU and
    optional residual.  x: (N, Cin, H, W), w: (Cout, Cin, 3, 3)."""
    n, cin, h, wd = x.shape
    cout = w.shape[0]
    d = dilation
    hp = h + 2 * d
    vmem_limit = _vmem_limit_bytes()
    th, wq = _conv_tiling(h, wd, cin, cout, d, residual is not None,
                          np.dtype(out_dtype).itemsize, vmem_limit)
    slab_len = th * wq
    n_row = h // th
    flat_len = hp * wq + 2 * d

    # Zero-pad: d rows top/bottom, d cols left, (wq - wd - d) cols right, plus a
    # 2d-element flat tail so the last tap's window stays inside the array.
    xpad = jnp.pad(x.astype(jnp.bfloat16),
                   ((0, 0), (0, 0), (d, d), (d, wq - wd - d)))
    xflat = jnp.pad(xpad.reshape(n, cin, hp * wq), ((0, 0), (0, 0), (0, 2 * d)))
    assert xflat.shape[-1] == flat_len

    # Weight columns ordered (ky, kx, cin) to match the in-kernel tap order.
    w9 = jnp.transpose(w, (0, 2, 3, 1)).reshape(cout, 9 * cin).astype(jnp.bfloat16)
    tap_starts = tuple((ky * d) * wq + kx * d for ky in range(3) for kx in range(3))

    add_res = residual is not None
    in_specs = [
        pl.BlockSpec((1, cin, slab_len), lambda b, r: (b, 0, r)),      # rows [r*TH, (r+1)*TH)
        pl.BlockSpec((1, cin, slab_len), lambda b, r: (b, 0, r + 1)),  # halo rows below
        pl.BlockSpec((cout, 9 * cin), lambda b, r: (0, 0)),
    ]
    args = [xflat, xflat, w9]
    if add_res:
        res_p = jnp.pad(residual, ((0, 0), (0, 0), (0, 0), (0, wq - wd)))
        args.append(res_p.reshape(n, cout, h * wq))
        in_specs.append(pl.BlockSpec((1, cout, slab_len), lambda b, r: (b, 0, r)))

    out = pl.pallas_call(
        partial(_conv3x3_kernel, slope=slope, add_residual=add_res,
                tap_starts=tap_starts, slab_len=slab_len),
        out_shape=jax.ShapeDtypeStruct((n, cout, h * wq), out_dtype),
        grid=(n, n_row),
        in_specs=in_specs,
        out_specs=pl.BlockSpec((1, cout, slab_len), lambda b, r: (b, 0, r)),
        scratch_shapes=[pltpu.VMEM((9 * cin, slab_len), jnp.bfloat16)],
        compiler_params=pltpu.CompilerParams(
            dimension_semantics=("parallel", "parallel"),
            vmem_limit_bytes=vmem_limit),
    )(*args)
    # Crop the junk columns introduced by computing on the width-padded grid.
    return out.reshape(n, cout, h, wq)[:, :, :, :wd]


# -----------------------------------------------------------------------------
# CrossAttention forward
# -----------------------------------------------------------------------------
def init_params(hidden, key):
    k1, k2, k3, k4 = jax.random.split(key, 4)
    s = 1.0 / math.sqrt(hidden * 9)
    return {
        # value_embedding: Conv2d(hidden, hidden, 1, bias=False) -> (Cout, Cin)
        "wv": jax.random.normal(k1, (hidden, hidden), jnp.float32) / math.sqrt(hidden),
        # output_linear: Conv2d(hidden, hidden, 3, pad=1, bias=False)
        "w_out": jax.random.normal(k2, (hidden, hidden, 3, 3), jnp.float32) * s,
        # FeedForward conv1: Conv2d(hidden, hidden, 3, pad=2, dil=2, bias=False)
        "w_ff1": jax.random.normal(k3, (hidden, hidden, 3, 3), jnp.float32) * s,
        # FeedForward conv2: Conv2d(hidden, hidden, 3, pad=1, bias=False)
        "w_ff2": jax.random.normal(k4, (hidden, hidden, 3, 3), jnp.float32) * s,
    }


@jax.jit
def cross_attention_forward(params, k, q, v):
    # v2 = SpatialAttention(k, q, value_embedding(v)); bf16 (only feeds a bf16 conv).
    v2 = spatial_attention(k, q, v, params["wv"], out_dtype=jnp.bfloat16)
    # update_v: v1 = v + LeakyReLU(Conv3x3(v2))            (fp32 residual chain)
    v1 = conv3x3_lrelu(v2, params["w_out"], dilation=1, residual=v,
                       out_dtype=jnp.float32)
    # feed_forward: v_out = v1 + LeakyReLU(Conv3x3(LeakyReLU(Conv3x3_dil2(v1))))
    h1 = conv3x3_lrelu(v1, params["w_ff1"], dilation=2, out_dtype=jnp.bfloat16)
    v_out = conv3x3_lrelu(h1, params["w_ff2"], dilation=1, residual=v1,
                          out_dtype=jnp.float32)
    return v_out
    # TODO(synk): the four pallas_calls could hand off tensors directly in the
    # padded flat conv layout to remove the remaining pad/crop XLA passes; kept
    # separate so each stage retains its own tiling at production sizes.


# -----------------------------------------------------------------------------
# Pure-JAX reference (fp32) for a tolerance check.
# -----------------------------------------------------------------------------
@jax.jit
def _reference_forward(params, k, q, v):
    n, ckq, h, w = k.shape
    c = v.shape[1]
    hw = h * w
    kt = jnp.swapaxes(k.reshape(n, ckq, hw), 1, 2)
    qf = q.reshape(n, ckq, hw)
    scores = jnp.einsum("nic,ncj->nij", kt, qf) / math.sqrt(ckq)
    p = jax.nn.softmax(scores, axis=1)                     # softmax over key axis
    vemb = jnp.einsum("oc,ncl->nol", params["wv"], v.reshape(n, c, hw))
    v2 = jnp.einsum("ncl,nlj->ncj", vemb, p).reshape(n, c, h, w)

    def conv(x, w_, d):
        y = lax.conv_general_dilated(
            x, w_, window_strides=(1, 1), padding=((d, d), (d, d)),
            rhs_dilation=(d, d), dimension_numbers=("NCHW", "OIHW", "NCHW"))
        return jnp.where(y > 0, y, 0.2 * y)

    v1 = v + conv(v2, params["w_out"], 1)
    h1 = conv(v1, params["w_ff1"], 2)
    return v1 + conv(h1, params["w_ff2"], 1)


if __name__ == "__main__":
    # Small shapes consistent with the module: kq_channels = 3 * hidden.
    batch, hidden, H, W = 2, 8, 8, 8
    kq_channels = hidden * 3

    key = jax.random.PRNGKey(0)
    pkey, kk_, kq_, kv_ = jax.random.split(key, 4)
    params = init_params(hidden, pkey)

    k_in = jax.random.normal(kk_, (batch, kq_channels, H, W), jnp.float32)
    q_in = jax.random.normal(kq_, (batch, kq_channels, H, W), jnp.float32)
    v_in = jax.random.normal(kv_, (batch, hidden, H, W), jnp.float32)

    out = cross_attention_forward(params, k_in, q_in, v_in)
    jax.block_until_ready(out)
    assert out.shape == (batch, hidden, H, W)
    assert bool(jnp.all(jnp.isfinite(out)))

    ref = _reference_forward(params, k_in, q_in, v_in)
    jax.block_until_ready(ref)
    err = float(jnp.max(jnp.abs(out - ref)))
    assert err < 1.5e-1, f"kernel deviates from reference: max|diff|={err}"

    print("KERNEL_OK")
</pallas_src>

<mosaic_0001>
module attributes {stable_mosaic.version = 11 : i64} {
  func.func @_attention_kernel(%arg0: i32, %arg1: i32, %arg2: i32, %arg3: memref<1x64x24xbf16, #tpu.memory_space<vmem>>, %arg4: memref<1x24x64xf32, #tpu.memory_space<vmem>>, %arg5: memref<1x8x64xbf16, #tpu.memory_space<vmem>>, %arg6: memref<1x8x64xbf16, #tpu.memory_space<vmem>>, %arg7: memref<1x64xf32, #tpu.memory_space<vmem>>, %arg8: memref<1x64xf32, #tpu.memory_space<vmem>>, %arg9: memref<8x64xf32, #tpu.memory_space<vmem>>) attributes {dimension_semantics = [#tpu.dimension_semantics<parallel>, #tpu.dimension_semantics<arbitrary>, #tpu.dimension_semantics<arbitrary>], iteration_bounds = array<i64: 2, 1, 1>, scalar_prefetch = 0 : i64, scratch_operands = 3 : i64, tpu.core_type = #tpu.core_type<tc>, window_params = [{transform_indices = @transform_0, window_bounds = array<i64: 1, 64, 24>}, {transform_indices = @transform_1, window_bounds = array<i64: 1, 24, 64>}, {transform_indices = @transform_2, window_bounds = array<i64: 1, 8, 64>}, {transform_indices = @transform_3, window_bounds = array<i64: 1, 8, 64>}]} {
    %c0_i32 = arith.constant 0 : i32
    %0 = arith.cmpi eq, %arg2, %c0_i32 : i32
    %1 = arith.extui %0 : i1 to i32
    %c0_i32_0 = arith.constant 0 : i32
    %2 = arith.cmpi ne, %1, %c0_i32_0 : i32
    scf.if %2 {
      %cst_27 = arith.constant 0xFF800000 : f32
      %39 = vector.broadcast %cst_27 : f32 to vector<1x64xf32>
      %c0_28 = arith.constant 0 : index
      %c0_29 = arith.constant 0 : index
      %40 = vector.load %arg7[%c0_28, %c0_29] : memref<1x64xf32, #tpu.memory_space<vmem>>, vector<1x64xf32>
      tpu.vector_store %arg7[%c0_28, %c0_29], %39 {strides = array<i32>} : memref<1x64xf32, #tpu.memory_space<vmem>>, vector<1x64xf32>,
      %cst_30 = arith.constant 0.000000e+00 : f32
      %41 = vector.broadcast %cst_30 : f32 to vector<1x64xf32>
      %c0_31 = arith.constant 0 : index
      %c0_32 = arith.constant 0 : index
      %42 = vector.load %arg8[%c0_31, %c0_32] : memref<1x64xf32, #tpu.memory_space<vmem>>, vector<1x64xf32>
      tpu.vector_store %arg8[%c0_31, %c0_32], %41 {strides = array<i32>} : memref<1x64xf32, #tpu.memory_space<vmem>>, vector<1x64xf32>,
      %cst_33 = arith.constant 0.000000e+00 : f32
      %43 = vector.broadcast %cst_33 : f32 to vector<8x64xf32>
      %c0_34 = arith.constant 0 : index
      %c0_35 = arith.constant 0 : index
      %44 = vector.load %arg9[%c0_34, %c0_35] : memref<8x64xf32, #tpu.memory_space<vmem>>, vector<8x64xf32>
      tpu.vector_store %arg9[%c0_34, %c0_35], %43 {strides = array<i32>} : memref<8x64xf32, #tpu.memory_space<vmem>>, vector<8x64xf32>,
    } else {
    }
    %c0 = arith.constant 0 : index
    %c0_1 = arith.constant 0 : index
    %c0_2 = arith.constant 0 : index
    %3 = vector.load %arg4[%c0, %c0_1, %c0_2] : memref<1x24x64xf32, #tpu.memory_space<vmem>>, vector<1x24x64xf32>
    %4 = vector.shape_cast %3 : vector<1x24x64xf32> to vector<24x64xf32>
    %cst = arith.constant 0.204124153 : f32
    %5 = vector.broadcast %cst : f32 to vector<24x64xf32>
    %6 = arith.mulf %4, %5 : vector<24x64xf32>
    %7 = arith.truncf %6 : vector<24x64xf32> to vector<24x64xbf16>
    %c0_3 = arith.constant 0 : index
    %c0_4 = arith.constant 0 : index
    %c0_5 = arith.constant 0 : index
    %8 = vector.load %arg3[%c0_3, %c0_4, %c0_5] : memref<1x64x24xbf16, #tpu.memory_space<vmem>>, vector<1x64x24xbf16>
    %9 = vector.shape_cast %8 : vector<1x64x24xbf16> to vector<64x24xbf16>
    %cst_6 = arith.constant dense<0.000000e+00> : vector<64x64xf32>
    %10 = tpu.matmul %9, %7, %cst_6 {dimension_numbers = #tpu.dot_dimension_numbers<[1], [0], [0], [1], [0, 0, 1, 1], [], []>} : vector<64x24xbf16>, vector<24x64xbf16>, vector<64x64xf32> -> vector<64x64xf32>
    %c0_7 = arith.constant 0 : index
    %c0_8 = arith.constant 0 : index
    %11 = vector.load %arg7[%c0_7, %c0_8] : memref<1x64xf32, #tpu.memory_space<vmem>>, vector<1x64xf32>
    %cst_9 = arith.constant dense<0xFF800000> : vector<64xf32>
    %12 = vector.multi_reduction <maximumf>, %10, %cst_9 [0] : vector<64x64xf32> to vector<64xf32>
    %13 = vector.shape_cast %12 : vector<64xf32> to vector<1x64xf32>
    %14 = arith.maximumf %11, %13 : vector<1x64xf32>
    %15 = arith.subf %11, %14 : vector<1x64xf32>
    %16 = math.exp %15 : vector<1x64xf32>
    %17 = vector.broadcast %14 : vector<1x64xf32> to vector<64x64xf32>
    %18 = arith.subf %10, %17 : vector<64x64xf32>
    %19 = math.exp %18 : vector<64x64xf32>
    %c0_10 = arith.constant 0 : index
    %c0_11 = arith.constant 0 : index
    %20 = vector.load %arg8[%c0_10, %c0_11] : memref<1x64xf32, #tpu.memory_space<vmem>>, vector<1x64xf32>
    %21 = arith.mulf %16, %20 : vector<1x64xf32>
    %cst_12 = arith.constant dense<0.000000e+00> : vector<64xf32>
    %22 = vector.multi_reduction <add>, %19, %cst_12 [0] : vector<64x64xf32> to vector<64xf32>
    %23 = vector.shape_cast %22 : vector<64xf32> to vector<1x64xf32>
    %24 = arith.addf %21, %23 : vector<1x64xf32>
    %c0_13 = arith.constant 0 : index
    %c0_14 = arith.constant 0 : index
    %25 = vector.load %arg8[%c0_13, %c0_14] : memref<1x64xf32, #tpu.memory_space<vmem>>, vector<1x64xf32>
    tpu.vector_store %arg8[%c0_13, %c0_14], %24 {strides = array<i32>} : memref<1x64xf32, #tpu.memory_space<vmem>>, vector<1x64xf32>,
    %c0_15 = arith.constant 0 : index
    %c0_16 = arith.constant 0 : index
    %c0_17 = arith.constant 0 : index
    %26 = vector.load %arg5[%c0_15, %c0_16, %c0_17] : memref<1x8x64xbf16, #tpu.memory_space<vmem>>, vector<1x8x64xbf16>
    %27 = vector.shape_cast %26 : vector<1x8x64xbf16> to vector<8x64xbf16>
    %28 = arith.truncf %19 : vector<64x64xf32> to vector<64x64xbf16>
    %cst_18 = arith.constant dense<0.000000e+00> : vector<8x64xf32>
    %29 = tpu.matmul %27, %28, %cst_18 {dimension_numbers = #tpu.dot_dimension_numbers<[1], [0], [0], [1], [0, 0, 1, 1], [], []>} : vector<8x64xbf16>, vector<64x64xbf16>, vector<8x64xf32> -> vector<8x64xf32>
    %c0_19 = arith.constant 0 : index
    %c0_20 = arith.constant 0 : index
    %30 = vector.load %arg9[%c0_19, %c0_20] : memref<8x64xf32, #tpu.memory_space<vmem>>, vector<8x64xf32>
    %31 = vector.broadcast %16 : vector<1x64xf32> to vector<8x64xf32>
    %32 = arith.mulf %31, %30 : vector<8x64xf32>
    %33 = arith.addf %32, %29 : vector<8x64xf32>
    %c0_21 = arith.constant 0 : index
    %c0_22 = arith.constant 0 : index
    %34 = vector.load %arg9[%c0_21, %c0_22] : memref<8x64xf32, #tpu.memory_space<vmem>>, vector<8x64xf32>
    tpu.vector_store %arg9[%c0_21, %c0_22], %33 {strides = array<i32>} : memref<8x64xf32, #tpu.memory_space<vmem>>, vector<8x64xf32>,
    %c0_23 = arith.constant 0 : index
    %c0_24 = arith.constant 0 : index
    %35 = vector.load %arg7[%c0_23, %c0_24] : memref<1x64xf32, #tpu.memory_space<vmem>>, vector<1x64xf32>
    tpu.vector_store %arg7[%c0_23, %c0_24], %14 {strides = array<i32>} : memref<1x64xf32, #tpu.memory_space<vmem>>, vector<1x64xf32>,
    %c0_i32_25 = arith.constant 0 : i32
    %36 = arith.cmpi eq, %arg2, %c0_i32_25 : i32
    %37 = arith.extui %36 : i1 to i32
    %c0_i32_26 = arith.constant 0 : i32
    %38 = arith.cmpi ne, %37, %c0_i32_26 : i32
    scf.if %38 {
      %c0_27 = arith.constant 0 : index
      %c0_28 = arith.constant 0 : index
      %39 = vector.load %arg8[%c0_27, %c0_28] : memref<1x64xf32, #tpu.memory_space<vmem>>, vector<1x64xf32>
      %40 = tpu.reciprocal %39 {approx = true} : vector<1x64xf32> -> vector<1x64xf32>
      %c0_29 = arith.constant 0 : index
      %c0_30 = arith.constant 0 : index
      %41 = vector.load %arg9[%c0_29, %c0_30] : memref<8x64xf32, #tpu.memory_space<vmem>>, vector<8x64xf32>
      %42 = vector.broadcast %40 : vector<1x64xf32> to vector<8x64xf32>
      %43 = arith.mulf %41, %42 : vector<8x64xf32>
      %44 = arith.truncf %43 : vector<8x64xf32> to vector<8x64xbf16>
      %c0_31 = arith.constant 0 : index
      %c0_32 = arith.constant 0 : index
      %c0_33 = arith.constant 0 : index
      %45 = vector.load %arg6[%c0_31, %c0_32, %c0_33] : memref<1x8x64xbf16, #tpu.memory_space<vmem>>, vector<1x8x64xbf16>
      %46 = vector.shape_cast %45 : vector<1x8x64xbf16> to vector<8x64xbf16>
      %47 = vector.shape_cast %44 : vector<8x64xbf16> to vector<1x8x64xbf16>
      tpu.vector_store %arg6[%c0_31, %c0_32, %c0_33], %47 {strides = array<i32>} : memref<1x8x64xbf16, #tpu.memory_space<vmem>>, vector<1x8x64xbf16>,
    } else {
    }
    return
  }
  func.func @transform_0(%arg0: i32, %arg1: i32, %arg2: i32) -> (i32, i32, i32) {
    %c0_i32 = arith.constant 0 : i32
    %c0_i32_0 = arith.constant 0 : i32
    return %arg0, %arg2, %c0_i32 : i32, i32, i32
  }
  func.func @transform_1(%arg0: i32, %arg1: i32, %arg2: i32) -> (i32, i32, i32) {
    %c0_i32 = arith.constant 0 : i32
    %c0_i32_0 = arith.constant 0 : i32
    return %arg0, %c0_i32, %arg1 : i32, i32, i32
  }
  func.func @transform_2(%arg0: i32, %arg1: i32, %arg2: i32) -> (i32, i32, i32) {
    %c0_i32 = arith.constant 0 : i32
    %c0_i32_0 = arith.constant 0 : i32
    return %arg0, %c0_i32, %arg2 : i32, i32, i32
  }
  func.func @transform_3(%arg0: i32, %arg1: i32, %arg2: i32) -> (i32, i32, i32) {
    %c0_i32 = arith.constant 0 : i32
    %c0_i32_0 = arith.constant 0 : i32
    return %arg0, %c0_i32, %arg1 : i32, i32, i32
  }
}

module attributes {stable_mosaic.version = 11 : i64} {
  func.func @_conv3x3_kernel(%arg0: i32, %arg1: i32, %arg2: memref<1x8x128xbf16, #tpu.memory_space<vmem>>, %arg3: memref<1x8x128xbf16, #tpu.memory_space<vmem>>, %arg4: memref<8x72xbf16, #tpu.memory_space<vmem>>, %arg5: memref<1x8x128xf32, #tpu.memory_space<vmem>>, %arg6: memref<1x8x128xf32, #tpu.memory_space<vmem>>, %arg7: memref<72x128xbf16, #tpu.memory_space<vmem>>) attributes {dimension_semantics = [#tpu.dimension_semantics<parallel>, #tpu.dimension_semantics<parallel>], iteration_bounds = array<i64: 2, 1>, scalar_prefetch = 0 : i64, scratch_operands = 1 : i64, tpu.core_type = #tpu.core_type<tc>, window_params = [{transform_indices = @transform_0, window_bounds = array<i64: 1, 8, 128>}, {transform_indices = @transform_1, window_bounds = array<i64: 1, 8, 128>}, {pipeline_mode = #tpu.pipeline_mode<synchronous>, transform_indices = @transform_2, window_bounds = array<i64: 8, 72>}, {transform_indices = @transform_3, window_bounds = array<i64: 1, 8, 128>}, {transform_indices = @transform_4, window_bounds = array<i64: 1, 8, 128>}]} {
    %c0 = arith.constant 0 : index
    %c0_0 = arith.constant 0 : index
    %c0_1 = arith.constant 0 : index
    %0 = vector.load %arg2[%c0, %c0_0, %c0_1] : memref<1x8x128xbf16, #tpu.memory_space<vmem>>, vector<1x8x128xbf16>
    %1 = vector.shape_cast %0 : vector<1x8x128xbf16> to vector<8x128xbf16>
    %c0_2 = arith.constant 0 : index
    %c0_3 = arith.constant 0 : index
    %2 = vector.load %arg7[%c0_2, %c0_3] : memref<72x128xbf16, #tpu.memory_space<vmem>>, vector<8x128xbf16>
    tpu.vector_store %arg7[%c0_2, %c0_3], %1 {strides = array<i32>} : memref<72x128xbf16, #tpu.memory_space<vmem>>, vector<8x128xbf16>,
    %c0_4 = arith.constant 0 : index
    %c0_5 = arith.constant 0 : index
    %c1 = arith.constant 1 : index
    %3 = vector.load %arg2[%c0_4, %c0_5, %c1] : memref<1x8x128xbf16, #tpu.memory_space<vmem>>, vector<1x8x127xbf16>
    %4 = vector.shape_cast %3 : vector<1x8x127xbf16> to vector<8x127xbf16>
    %c8 = arith.constant 8 : index
    %c0_6 = arith.constant 0 : index
    %5 = vector.load %arg7[%c8, %c0_6] : memref<72x128xbf16, #tpu.memory_space<vmem>>, vector<8x127xbf16>
    tpu.vector_store %arg7[%c8, %c0_6], %4 {strides = array<i32>} : memref<72x128xbf16, #tpu.memory_space<vmem>>, vector<8x127xbf16>,
    %c0_7 = arith.constant 0 : index
    %c0_8 = arith.constant 0 : index
    %c0_9 = arith.constant 0 : index
    %6 = vector.load %arg3[%c0_7, %c0_8, %c0_9] : memref<1x8x128xbf16, #tpu.memory_space<vmem>>, vector<1x8x1xbf16>
    %7 = vector.shape_cast %6 : vector<1x8x1xbf16> to vector<8x1xbf16>
    %c8_10 = arith.constant 8 : index
    %c127 = arith.constant 127 : index
    %8 = vector.load %arg7[%c8_10, %c127] : memref<72x128xbf16, #tpu.memory_space<vmem>>, vector<8x1xbf16>
    tpu.vector_store %arg7[%c8_10, %c127], %7 {strides = array<i32>} : memref<72x128xbf16, #tpu.memory_space<vmem>>, vector<8x1xbf16>,
    %c0_11 = arith.constant 0 : index
    %c0_12 = arith.constant 0 : index
    %c2 = arith.constant 2 : index
    %9 = vector.load %arg2[%c0_11, %c0_12, %c2] : memref<1x8x128xbf16, #tpu.memory_space<vmem>>, vector<1x8x126xbf16>
    %10 = vector.shape_cast %9 : vector<1x8x126xbf16> to vector<8x126xbf16>
    %c16 = arith.constant 16 : index
    %c0_13 = arith.constant 0 : index
    %11 = vector.load %arg7[%c16, %c0_13] : memref<72x128xbf16, #tpu.memory_space<vmem>>, vector<8x126xbf16>
    tpu.vector_store %arg7[%c16, %c0_13], %10 {strides = array<i32>} : memref<72x128xbf16, #tpu.memory_space<vmem>>, vector<8x126xbf16>,
    %c0_14 = arith.constant 0 : index
    %c0_15 = arith.constant 0 : index
    %c0_16 = arith.constant 0 : index
    %12 = vector.load %arg3[%c0_14, %c0_15, %c0_16] : memref<1x8x128xbf16, #tpu.memory_space<vmem>>, vector<1x8x2xbf16>
    %13 = vector.shape_cast %12 : vector<1x8x2xbf16> to vector<8x2xbf16>
    %c16_17 = arith.constant 16 : index
    %c126 = arith.constant 126 : index
    %14 = vector.load %arg7[%c16_17, %c126] : memref<72x128xbf16, #tpu.memory_space<vmem>>, vector<8x2xbf16>
    tpu.vector_store %arg7[%c16_17, %c126], %13 {strides = array<i32>} : memref<72x128xbf16, #tpu.memory_space<vmem>>, vector<8x2xbf16>,
    %c0_18 = arith.constant 0 : index
    %c0_19 = arith.constant 0 : index
    %c16_20 = arith.constant 16 : index
    %15 = vector.load %arg2[%c0_18, %c0_19, %c16_20] : memref<1x8x128xbf16, #tpu.memory_space<vmem>>, vector<1x8x112xbf16>
    %16 = vector.shape_cast %15 : vector<1x8x112xbf16> to vector<8x112xbf16>
    %c24 = arith.constant 24 : index
    %c0_21 = arith.constant 0 : index
    %17 = vector.load %arg7[%c24, %c0_21] : memref<72x128xbf16, #tpu.memory_space<vmem>>, vector<8x112xbf16>
    tpu.vector_store %arg7[%c24, %c0_21], %16 {strides = array<i32>} : memref<72x128xbf16, #tpu.memory_space<vmem>>, vector<8x112xbf16>,
    %c0_22 = arith.constant 0 : index
    %c0_23 = arith.constant 0 : index
    %c0_24 = arith.constant 0 : index
    %18 = vector.load %arg3[%c0_22, %c0_23, %c0_24] : memref<1x8x128xbf16, #tpu.memory_space<vmem>>, vector<1x8x16xbf16>
    %19 = vector.shape_cast %18 : vector<1x8x16xbf16> to vector<8x16xbf16>
    %c24_25 = arith.constant 24 : index
    %c112 = arith.constant 112 : index
    %20 = vector.load %arg7[%c24_25, %c112] : memref<72x128xbf16, #tpu.memory_space<vmem>>, vector<8x16xbf16>
    tpu.vector_store %arg7[%c24_25, %c112], %19 {strides = array<i32>} : memref<72x128xbf16, #tpu.memory_space<vmem>>, vector<8x16xbf16>,
    %c0_26 = arith.constant 0 : index
    %c0_27 = arith.constant 0 : index
    %c17 = arith.constant 17 : index
    %21 = vector.load %arg2[%c0_26, %c0_27, %c17] : memref<1x8x128xbf16, #tpu.memory_space<vmem>>, vector<1x8x111xbf16>
    %22 = vector.shape_cast %21 : vector<1x8x111xbf16> to vector<8x111xbf16>
    %c32 = arith.constant 32 : index
    %c0_28 = arith.constant 0 : index
    %23 = vector.load %arg7[%c32, %c0_28] : memref<72x128xbf16, #tpu.memory_space<vmem>>, vector<8x111xbf16>
    tpu.vector_store %arg7[%c32, %c0_28], %22 {strides = array<i32>} : memref<72x128xbf16, #tpu.memory_space<vmem>>, vector<8x111xbf16>,
    %c0_29 = arith.constant 0 : index
    %c0_30 = arith.constant 0 : index
    %c0_31 = arith.constant 0 : index
    %24 = vector.load %arg3[%c0_29, %c0_30, %c0_31] : memref<1x8x128xbf16, #tpu.memory_space<vmem>>, vector<1x8x17xbf16>
    %25 = vector.shape_cast %24 : vector<1x8x17xbf16> to vector<8x17xbf16>
    %c32_32 = arith.constant 32 : index
    %c111 = arith.constant 111 : index
    %26 = vector.load %arg7[%c32_32, %c111] : memref<72x128xbf16, #tpu.memory_space<vmem>>, vector<8x17xbf16>
    tpu.vector_store %arg7[%c32_32, %c111], %25 {strides = array<i32>} : memref<72x128xbf16, #tpu.memory_space<vmem>>, vector<8x17xbf16>,
    %c0_33 = arith.constant 0 : index
    %c0_34 = arith.constant 0 : index
    %c18 = arith.constant 18 : index
    %27 = vector.load %arg2[%c0_33, %c0_34, %c18] : memref<1x8x128xbf16, #tpu.memory_space<vmem>>, vector<1x8x110xbf16>
    %28 = vector.shape_cast %27 : vector<1x8x110xbf16> to vector<8x110xbf16>
    %c40 = arith.constant 40 : index
    %c0_35 = arith.constant 0 : index
    %29 = vector.load %arg7[%c40, %c0_35] : memref<72x128xbf16, #tpu.memory_space<vmem>>, vector<8x110xbf16>
    tpu.vector_store %arg7[%c40, %c0_35], %28 {strides = array<i32>} : memref<72x128xbf16, #tpu.memory_space<vmem>>, vector<8x110xbf16>,
    %c0_36 = arith.constant 0 : index
    %c0_37 = arith.constant 0 : index
    %c0_38 = arith.constant 0 : index
    %30 = vector.load %arg3[%c0_36, %c0_37, %c0_38] : memref<1x8x128xbf16, #tpu.memory_space<vmem>>, vector<1x8x18xbf16>
    %31 = vector.shape_cast %30 : vector<1x8x18xbf16> to vector<8x18xbf16>
    %c40_39 = arith.constant 40 : index
    %c110 = arith.constant 110 : index
    %32 = vector.load %arg7[%c40_39, %c110] : memref<72x128xbf16, #tpu.memory_space<vmem>>, vector<8x18xbf16>
    tpu.vector_store %arg7[%c40_39, %c110], %31 {strides = array<i32>} : memref<72x128xbf16, #tpu.memory_space<vmem>>, vector<8x18xbf16>,
    %c0_40 = arith.constant 0 : index
    %c0_41 = arith.constant 0 : index
    %c32_42 = arith.constant 32 : index
    %33 = vector.load %arg2[%c0_40, %c0_41, %c32_42] : memref<1x8x128xbf16, #tpu.memory_space<vmem>>, vector<1x8x96xbf16>
    %34 = vector.shape_cast %33 : vector<1x8x96xbf16> to vector<8x96xbf16>
    %c48 = arith.constant 48 : index
    %c0_43 = arith.constant 0 : index
    %35 = vector.load %arg7[%c48, %c0_43] : memref<72x128xbf16, #tpu.memory_space<vmem>>, vector<8x96xbf16>
    tpu.vector_store %arg7[%c48, %c0_43], %34 {strides = array<i32>} : memref<72x128xbf16, #tpu.memory_space<vmem>>, vector<8x96xbf16>,
    %c0_44 = arith.constant 0 : index
    %c0_45 = arith.constant 0 : index
    %c0_46 = arith.constant 0 : index
    %36 = vector.load %arg3[%c0_44, %c0_45, %c0_46] : memref<1x8x128xbf16, #tpu.memory_space<vmem>>, vector<1x8x32xbf16>
    %37 = vector.shape_cast %36 : vector<1x8x32xbf16> to vector<8x32xbf16>
    %c48_47 = arith.constant 48 : index
    %c96 = arith.constant 96 : index
    %38 = vector.load %arg7[%c48_47, %c96] : memref<72x128xbf16, #tpu.memory_space<vmem>>, vector<8x32xbf16>
    tpu.vector_store %arg7[%c48_47, %c96], %37 {strides = array<i32>} : memref<72x128xbf16, #tpu.memory_space<vmem>>, vector<8x32xbf16>,
    %c0_48 = arith.constant 0 : index
    %c0_49 = arith.constant 0 : index
    %c33 = arith.constant 33 : index
    %39 = vector.load %arg2[%c0_48, %c0_49, %c33] : memref<1x8x128xbf16, #tpu.memory_space<vmem>>, vector<1x8x95xbf16>
    %40 = vector.shape_cast %39 : vector<1x8x95xbf16> to vector<8x95xbf16>
    %c56 = arith.constant 56 : index
    %c0_50 = arith.constant 0 : index
    %41 = vector.load %arg7[%c56, %c0_50] : memref<72x128xbf16, #tpu.memory_space<vmem>>, vector<8x95xbf16>
    tpu.vector_store %arg7[%c56, %c0_50], %40 {strides = array<i32>} : memref<72x128xbf16, #tpu.memory_space<vmem>>, vector<8x95xbf16>,
    %c0_51 = arith.constant 0 : index
    %c0_52 = arith.constant 0 : index
    %c0_53 = arith.constant 0 : index
    %42 = vector.load %arg3[%c0_51, %c0_52, %c0_53] : memref<1x8x128xbf16, #tpu.memory_space<vmem>>, vector<1x8x33xbf16>
    %43 = vector.shape_cast %42 : vector<1x8x33xbf16> to vector<8x33xbf16>
    %c56_54 = arith.constant 56 : index
    %c95 = arith.constant 95 : index
    %44 = vector.load %arg7[%c56_54, %c95] : memref<72x128xbf16, #tpu.memory_space<vmem>>, vector<8x33xbf16>
    tpu.vector_store %arg7[%c56_54, %c95], %43 {strides = array<i32>} : memref<72x128xbf16, #tpu.memory_space<vmem>>, vector<8x33xbf16>,
    %c0_55 = arith.constant 0 : index
    %c0_56 = arith.constant 0 : index
    %c34 = arith.constant 34 : index
    %45 = vector.load %arg2[%c0_55, %c0_56, %c34] : memref<1x8x128xbf16, #tpu.memory_space<vmem>>, vector<1x8x94xbf16>
    %46 = vector.shape_cast %45 : vector<1x8x94xbf16> to vector<8x94xbf16>
    %c64 = arith.constant 64 : index
    %c0_57 = arith.constant 0 : index
    %47 = vector.load %arg7[%c64, %c0_57] : memref<72x128xbf16, #tpu.memory_space<vmem>>, vector<8x94xbf16>
    tpu.vector_store %arg7[%c64, %c0_57], %46 {strides = array<i32>} : memref<72x128xbf16, #tpu.memory_space<vmem>>, vector<8x94xbf16>,
    %c0_58 = arith.constant 0 : index
    %c0_59 = arith.constant 0 : index
    %c0_60 = arith.constant 0 : index
    %48 = vector.load %arg3[%c0_58, %c0_59, %c0_60] : memref<1x8x128xbf16, #tpu.memory_space<vmem>>, vector<1x8x34xbf16>
    %49 = vector.shape_cast %48 : vector<1x8x34xbf16> to vector<8x34xbf16>
    %c64_61 = arith.constant 64 : index
    %c94 = arith.constant 94 : index
    %50 = vector.load %arg7[%c64_61, %c94] : memref<72x128xbf16, #tpu.memory_space<vmem>>, vector<8x34xbf16>
    tpu.vector_store %arg7[%c64_61, %c94], %49 {strides = array<i32>} : memref<72x128xbf16, #tpu.memory_space<vmem>>, vector<8x34xbf16>,
    %c0_62 = arith.constant 0 : index
    %c0_63 = arith.constant 0 : index
    %51 = vector.load %arg4[%c0_62, %c0_63] : memref<8x72xbf16, #tpu.memory_space<vmem>>, vector<8x72xbf16>
    %c0_64 = arith.constant 0 : index
    %c0_65 = arith.constant 0 : index
    %52 = vector.load %arg7[%c0_64, %c0_65] : memref<72x128xbf16, #tpu.memory_space<vmem>>, vector<72x128xbf16>
    %cst = arith.constant dense<0.000000e+00> : vector<8x128xf32>
    %53 = tpu.matmul %51, %52, %cst {dimension_numbers = #tpu.dot_dimension_numbers<[1], [0], [0], [1], [0, 0, 1, 1], [], []>} : vector<8x72xbf16>, vector<72x128xbf16>, vector<8x128xf32> -> vector<8x128xf32>
    %cst_66 = arith.constant 0.000000e+00 : f32
    %54 = vector.broadcast %cst_66 : f32 to vector<8x128xf32>
    %55 = arith.cmpf ogt, %53, %54 : vector<8x128xf32>
    %cst_67 = arith.constant 2.000000e-01 : f32
    %56 = vector.broadcast %cst_67 : f32 to vector<8x128xf32>
    %57 = arith.mulf %56, %53 : vector<8x128xf32>
    %58 = arith.select %55, %53, %57 : vector<8x128xi1>, vector<8x128xf32>
    %c0_68 = arith.constant 0 : index
    %c0_69 = arith.constant 0 : index
    %c0_70 = arith.constant 0 : index
    %59 = vector.load %arg5[%c0_68, %c0_69, %c0_70] : memref<1x8x128xf32, #tpu.memory_space<vmem>>, vector<1x8x128xf32>
    %60 = vector.shape_cast %59 : vector<1x8x128xf32> to vector<8x128xf32>
    %61 = arith.addf %58, %60 : vector<8x128xf32>
    %c0_71 = arith.constant 0 : index
    %c0_72 = arith.constant 0 : index
    %c0_73 = arith.constant 0 : index
    %62 = vector.load %arg6[%c0_71, %c0_72, %c0_73] : memref<1x8x128xf32, #tpu.memory_space<vmem>>, vector<1x8x128xf32>
    %63 = vector.shape_cast %62 : vector<1x8x128xf32> to vector<8x128xf32>
    %64 = vector.shape_cast %61 : vector<8x128xf32> to vector<1x8x128xf32>
    tpu.vector_store %arg6[%c0_71, %c0_72, %c0_73], %64 {strides = array<i32>} : memref<1x8x128xf32, #tpu.memory_space<vmem>>, vector<1x8x128xf32>,
    return
  }
  func.func @transform_0(%arg0: i32, %arg1: i32) -> (i32, i32, i32) {
    %c0_i32 = arith.constant 0 : i32
    %c0_i32_0 = arith.constant 0 : i32
    return %arg0, %c0_i32, %arg1 : i32, i32, i32
  }
  func.func @transform_1(%arg0: i32, %arg1: i32) -> (i32, i32, i32) {
    %c1_i32 = arith.constant 1 : i32
    %0 = arith.addi %arg1, %c1_i32 : i32
    %c0_i32 = arith.constant 0 : i32
    %c0_i32_0 = arith.constant 0 : i32
    return %arg0, %c0_i32, %0 : i32, i32, i32
  }
  func.func @transform_2(%arg0: i32, %arg1: i32) -> (i32, i32) {
    %c0_i32 = arith.constant 0 : i32
    %c0_i32_0 = arith.constant 0 : i32
    %c0_i32_1 = arith.constant 0 : i32
    return %c0_i32, %c0_i32_0 : i32, i32
  }
  func.func @transform_3(%arg0: i32, %arg1: i32) -> (i32, i32, i32) {
    %c0_i32 = arith.constant 0 : i32
    %c0_i32_0 = arith.constant 0 : i32
    return %arg0, %c0_i32, %arg1 : i32, i32, i32
  }
  func.func @transform_4(%arg0: i32, %arg1: i32) -> (i32, i32, i32) {
    %c0_i32 = arith.constant 0 : i32
    %c0_i32_0 = arith.constant 0 : i32
    return %arg0, %c0_i32, %arg1 : i32, i32, i32
  }
}

module attributes {stable_mosaic.version = 11 : i64} {
  func.func @_conv3x3_kernel(%arg0: i32, %arg1: i32, %arg2: memref<1x8x128xbf16, #tpu.memory_space<vmem>>, %arg3: memref<1x8x128xbf16, #tpu.memory_space<vmem>>, %arg4: memref<8x72xbf16, #tpu.memory_space<vmem>>, %arg5: memref<1x8x128xbf16, #tpu.memory_space<vmem>>, %arg6: memref<72x128xbf16, #tpu.memory_space<vmem>>) attributes {dimension_semantics = [#tpu.dimension_semantics<parallel>, #tpu.dimension_semantics<parallel>], iteration_bounds = array<i64: 2, 1>, scalar_prefetch = 0 : i64, scratch_operands = 1 : i64, tpu.core_type = #tpu.core_type<tc>, window_params = [{transform_indices = @transform_0, window_bounds = array<i64: 1, 8, 128>}, {transform_indices = @transform_1, window_bounds = array<i64: 1, 8, 128>}, {pipeline_mode = #tpu.pipeline_mode<synchronous>, transform_indices = @transform_2, window_bounds = array<i64: 8, 72>}, {transform_indices = @transform_3, window_bounds = array<i64: 1, 8, 128>}]} {
    %c0 = arith.constant 0 : index
    %c0_0 = arith.constant 0 : index
    %c0_1 = arith.constant 0 : index
    %0 = vector.load %arg2[%c0, %c0_0, %c0_1] : memref<1x8x128xbf16, #tpu.memory_space<vmem>>, vector<1x8x128xbf16>
    %1 = vector.shape_cast %0 : vector<1x8x128xbf16> to vector<8x128xbf16>
    %c0_2 = arith.constant 0 : index
    %c0_3 = arith.constant 0 : index
    %2 = vector.load %arg6[%c0_2, %c0_3] : memref<72x128xbf16, #tpu.memory_space<vmem>>, vector<8x128xbf16>
    tpu.vector_store %arg6[%c0_2, %c0_3], %1 {strides = array<i32>} : memref<72x128xbf16, #tpu.memory_space<vmem>>, vector<8x128xbf16>,
    %c0_4 = arith.constant 0 : index
    %c0_5 = arith.constant 0 : index
    %c2 = arith.constant 2 : index
    %3 = vector.load %arg2[%c0_4, %c0_5, %c2] : memref<1x8x128xbf16, #tpu.memory_space<vmem>>, vector<1x8x126xbf16>
    %4 = vector.shape_cast %3 : vector<1x8x126xbf16> to vector<8x126xbf16>
    %c8 = arith.constant 8 : index
    %c0_6 = arith.constant 0 : index
    %5 = vector.load %arg6[%c8, %c0_6] : memref<72x128xbf16, #tpu.memory_space<vmem>>, vector<8x126xbf16>
    tpu.vector_store %arg6[%c8, %c0_6], %4 {strides = array<i32>} : memref<72x128xbf16, #tpu.memory_space<vmem>>, vector<8x126xbf16>,
    %c0_7 = arith.constant 0 : index
    %c0_8 = arith.constant 0 : index
    %c0_9 = arith.constant 0 : index
    %6 = vector.load %arg3[%c0_7, %c0_8, %c0_9] : memref<1x8x128xbf16, #tpu.memory_space<vmem>>, vector<1x8x2xbf16>
    %7 = vector.shape_cast %6 : vector<1x8x2xbf16> to vector<8x2xbf16>
    %c8_10 = arith.constant 8 : index
    %c126 = arith.constant 126 : index
    %8 = vector.load %arg6[%c8_10, %c126] : memref<72x128xbf16, #tpu.memory_space<vmem>>, vector<8x2xbf16>
    tpu.vector_store %arg6[%c8_10, %c126], %7 {strides = array<i32>} : memref<72x128xbf16, #tpu.memory_space<vmem>>, vector<8x2xbf16>,
    %c0_11 = arith.constant 0 : index
    %c0_12 = arith.constant 0 : index
    %c4 = arith.constant 4 : index
    %9 = vector.load %arg2[%c0_11, %c0_12, %c4] : memref<1x8x128xbf16, #tpu.memory_space<vmem>>, vector<1x8x124xbf16>
    %10 = vector.shape_cast %9 : vector<1x8x124xbf16> to vector<8x124xbf16>
    %c16 = arith.constant 16 : index
    %c0_13 = arith.constant 0 : index
    %11 = vector.load %arg6[%c16, %c0_13] : memref<72x128xbf16, #tpu.memory_space<vmem>>, vector<8x124xbf16>
    tpu.vector_store %arg6[%c16, %c0_13], %10 {strides = array<i32>} : memref<72x128xbf16, #tpu.memory_space<vmem>>, vector<8x124xbf16>,
    %c0_14 = arith.constant 0 : index
    %c0_15 = arith.constant 0 : index
    %c0_16 = arith.constant 0 : index
    %12 = vector.load %arg3[%c0_14, %c0_15, %c0_16] : memref<1x8x128xbf16, #tpu.memory_space<vmem>>, vector<1x8x4xbf16>
    %13 = vector.shape_cast %12 : vector<1x8x4xbf16> to vector<8x4xbf16>
    %c16_17 = arith.constant 16 : index
    %c124 = arith.constant 124 : index
    %14 = vector.load %arg6[%c16_17, %c124] : memref<72x128xbf16, #tpu.memory_space<vmem>>, vector<8x4xbf16>
    tpu.vector_store %arg6[%c16_17, %c124], %13 {strides = array<i32>} : memref<72x128xbf16, #tpu.memory_space<vmem>>, vector<8x4xbf16>,
    %c0_18 = arith.constant 0 : index
    %c0_19 = arith.constant 0 : index
    %c32 = arith.constant 32 : index
    %15 = vector.load %arg2[%c0_18, %c0_19, %c32] : memref<1x8x128xbf16, #tpu.memory_space<vmem>>, vector<1x8x96xbf16>
    %16 = vector.shape_cast %15 : vector<1x8x96xbf16> to vector<8x96xbf16>
    %c24 = arith.constant 24 : index
    %c0_20 = arith.constant 0 : index
    %17 = vector.load %arg6[%c24, %c0_20] : memref<72x128xbf16, #tpu.memory_space<vmem>>, vector<8x96xbf16>
    tpu.vector_store %arg6[%c24, %c0_20], %16 {strides = array<i32>} : memref<72x128xbf16, #tpu.memory_space<vmem>>, vector<8x96xbf16>,
    %c0_21 = arith.constant 0 : index
    %c0_22 = arith.constant 0 : index
    %c0_23 = arith.constant 0 : index
    %18 = vector.load %arg3[%c0_21, %c0_22, %c0_23] : memref<1x8x128xbf16, #tpu.memory_space<vmem>>, vector<1x8x32xbf16>
    %19 = vector.shape_cast %18 : vector<1x8x32xbf16> to vector<8x32xbf16>
    %c24_24 = arith.constant 24 : index
    %c96 = arith.constant 96 : index
    %20 = vector.load %arg6[%c24_24, %c96] : memref<72x128xbf16, #tpu.memory_space<vmem>>, vector<8x32xbf16>
    tpu.vector_store %arg6[%c24_24, %c96], %19 {strides = array<i32>} : memref<72x128xbf16, #tpu.memory_space<vmem>>, vector<8x32xbf16>,
    %c0_25 = arith.constant 0 : index
    %c0_26 = arith.constant 0 : index
    %c34 = arith.constant 34 : index
    %21 = vector.load %arg2[%c0_25, %c0_26, %c34] : memref<1x8x128xbf16, #tpu.memory_space<vmem>>, vector<1x8x94xbf16>
    %22 = vector.shape_cast %21 : vector<1x8x94xbf16> to vector<8x94xbf16>
    %c32_27 = arith.constant 32 : index
    %c0_28 = arith.constant 0 : index
    %23 = vector.load %arg6[%c32_27, %c0_28] : memref<72x128xbf16, #tpu.memory_space<vmem>>, vector<8x94xbf16>
    tpu.vector_store %arg6[%c32_27, %c0_28], %22 {strides = array<i32>} : memref<72x128xbf16, #tpu.memory_space<vmem>>, vector<8x94xbf16>,
    %c0_29 = arith.constant 0 : index
    %c0_30 = arith.constant 0 : index
    %c0_31 = arith.constant 0 : index
    %24 = vector.load %arg3[%c0_29, %c0_30, %c0_31] : memref<1x8x128xbf16, #tpu.memory_space<vmem>>, vector<1x8x34xbf16>
    %25 = vector.shape_cast %24 : vector<1x8x34xbf16> to vector<8x34xbf16>
    %c32_32 = arith.constant 32 : index
    %c94 = arith.constant 94 : index
    %26 = vector.load %arg6[%c32_32, %c94] : memref<72x128xbf16, #tpu.memory_space<vmem>>, vector<8x34xbf16>
    tpu.vector_store %arg6[%c32_32, %c94], %25 {strides = array<i32>} : memref<72x128xbf16, #tpu.memory_space<vmem>>, vector<8x34xbf16>,
    %c0_33 = arith.constant 0 : index
    %c0_34 = arith.constant 0 : index
    %c36 = arith.constant 36 : index
    %27 = vector.load %arg2[%c0_33, %c0_34, %c36] : memref<1x8x128xbf16, #tpu.memory_space<vmem>>, vector<1x8x92xbf16>
    %28 = vector.shape_cast %27 : vector<1x8x92xbf16> to vector<8x92xbf16>
    %c40 = arith.constant 40 : index
    %c0_35 = arith.constant 0 : index
    %29 = vector.load %arg6[%c40, %c0_35] : memref<72x128xbf16, #tpu.memory_space<vmem>>, vector<8x92xbf16>
    tpu.vector_store %arg6[%c40, %c0_35], %28 {strides = array<i32>} : memref<72x128xbf16, #tpu.memory_space<vmem>>, vector<8x92xbf16>,
    %c0_36 = arith.constant 0 : index
    %c0_37 = arith.constant 0 : index
    %c0_38 = arith.constant 0 : index
    %30 = vector.load %arg3[%c0_36, %c0_37, %c0_38] : memref<1x8x128xbf16, #tpu.memory_space<vmem>>, vector<1x8x36xbf16>
    %31 = vector.shape_cast %30 : vector<1x8x36xbf16> to vector<8x36xbf16>
    %c40_39 = arith.constant 40 : index
    %c92 = arith.constant 92 : index
    %32 = vector.load %arg6[%c40_39, %c92] : memref<72x128xbf16, #tpu.memory_space<vmem>>, vector<8x36xbf16>
    tpu.vector_store %arg6[%c40_39, %c92], %31 {strides = array<i32>} : memref<72x128xbf16, #tpu.memory_space<vmem>>, vector<8x36xbf16>,
    %c0_40 = arith.constant 0 : index
    %c0_41 = arith.constant 0 : index
    %c64 = arith.constant 64 : index
    %33 = vector.load %arg2[%c0_40, %c0_41, %c64] : memref<1x8x128xbf16, #tpu.memory_space<vmem>>, vector<1x8x64xbf16>
    %34 = vector.shape_cast %33 : vector<1x8x64xbf16> to vector<8x64xbf16>
    %c48 = arith.constant 48 : index
    %c0_42 = arith.constant 0 : index
    %35 = vector.load %arg6[%c48, %c0_42] : memref<72x128xbf16, #tpu.memory_space<vmem>>, vector<8x64xbf16>
    tpu.vector_store %arg6[%c48, %c0_42], %34 {strides = array<i32>} : memref<72x128xbf16, #tpu.memory_space<vmem>>, vector<8x64xbf16>,
    %c0_43 = arith.constant 0 : index
    %c0_44 = arith.constant 0 : index
    %c0_45 = arith.constant 0 : index
    %36 = vector.load %arg3[%c0_43, %c0_44, %c0_45] : memref<1x8x128xbf16, #tpu.memory_space<vmem>>, vector<1x8x64xbf16>
    %37 = vector.shape_cast %36 : vector<1x8x64xbf16> to vector<8x64xbf16>
    %c48_46 = arith.constant 48 : index
    %c64_47 = arith.constant 64 : index
    %38 = vector.load %arg6[%c48_46, %c64_47] : memref<72x128xbf16, #tpu.memory_space<vmem>>, vector<8x64xbf16>
    tpu.vector_store %arg6[%c48_46, %c64_47], %37 {strides = array<i32>} : memref<72x128xbf16, #tpu.memory_space<vmem>>, vector<8x64xbf16>,
    %c0_48 = arith.constant 0 : index
    %c0_49 = arith.constant 0 : index
    %c66 = arith.constant 66 : index
    %39 = vector.load %arg2[%c0_48, %c0_49, %c66] : memref<1x8x128xbf16, #tpu.memory_space<vmem>>, vector<1x8x62xbf16>
    %40 = vector.shape_cast %39 : vector<1x8x62xbf16> to vector<8x62xbf16>
    %c56 = arith.constant 56 : index
    %c0_50 = arith.constant 0 : index
    %41 = vector.load %arg6[%c56, %c0_50] : memref<72x128xbf16, #tpu.memory_space<vmem>>, vector<8x62xbf16>
    tpu.vector_store %arg6[%c56, %c0_50], %40 {strides = array<i32>} : memref<72x128xbf16, #tpu.memory_space<vmem>>, vector<8x62xbf16>,
    %c0_51 = arith.constant 0 : index
    %c0_52 = arith.constant 0 : index
    %c0_53 = arith.constant 0 : index
    %42 = vector.load %arg3[%c0_51, %c0_52, %c0_53] : memref<1x8x128xbf16, #tpu.memory_space<vmem>>, vector<1x8x66xbf16>
    %43 = vector.shape_cast %42 : vector<1x8x66xbf16> to vector<8x66xbf16>
    %c56_54 = arith.constant 56 : index
    %c62 = arith.constant 62 : index
    %44 = vector.load %arg6[%c56_54, %c62] : memref<72x128xbf16, #tpu.memory_space<vmem>>, vector<8x66xbf16>
    tpu.vector_store %arg6[%c56_54, %c62], %43 {strides = array<i32>} : memref<72x128xbf16, #tpu.memory_space<vmem>>, vector<8x66xbf16>,
    %c0_55 = arith.constant 0 : index
    %c0_56 = arith.constant 0 : index
    %c68 = arith.constant 68 : index
    %45 = vector.load %arg2[%c0_55, %c0_56, %c68] : memref<1x8x128xbf16, #tpu.memory_space<vmem>>, vector<1x8x60xbf16>
    %46 = vector.shape_cast %45 : vector<1x8x60xbf16> to vector<8x60xbf16>
    %c64_57 = arith.constant 64 : index
    %c0_58 = arith.constant 0 : index
    %47 = vector.load %arg6[%c64_57, %c0_58] : memref<72x128xbf16, #tpu.memory_space<vmem>>, vector<8x60xbf16>
    tpu.vector_store %arg6[%c64_57, %c0_58], %46 {strides = array<i32>} : memref<72x128xbf16, #tpu.memory_space<vmem>>, vector<8x60xbf16>,
    %c0_59 = arith.constant 0 : index
    %c0_60 = arith.constant 0 : index
    %c0_61 = arith.constant 0 : index
    %48 = vector.load %arg3[%c0_59, %c0_60, %c0_61] : memref<1x8x128xbf16, #tpu.memory_space<vmem>>, vector<1x8x68xbf16>
    %49 = vector.shape_cast %48 : vector<1x8x68xbf16> to vector<8x68xbf16>
    %c64_62 = arith.constant 64 : index
    %c60 = arith.constant 60 : index
    %50 = vector.load %arg6[%c64_62, %c60] : memref<72x128xbf16, #tpu.memory_space<vmem>>, vector<8x68xbf16>
    tpu.vector_store %arg6[%c64_62, %c60], %49 {strides = array<i32>} : memref<72x128xbf16, #tpu.memory_space<vmem>>, vector<8x68xbf16>,
    %c0_63 = arith.constant 0 : index
    %c0_64 = arith.constant 0 : index
    %51 = vector.load %arg4[%c0_63, %c0_64] : memref<8x72xbf16, #tpu.memory_space<vmem>>, vector<8x72xbf16>
    %c0_65 = arith.constant 0 : index
    %c0_66 = arith.constant 0 : index
    %52 = vector.load %arg6[%c0_65, %c0_66] : memref<72x128xbf16, #tpu.memory_space<vmem>>, vector<72x128xbf16>
    %cst = arith.constant dense<0.000000e+00> : vector<8x128xf32>
    %53 = tpu.matmul %51, %52, %cst {dimension_numbers = #tpu.dot_dimension_numbers<[1], [0], [0], [1], [0, 0, 1, 1], [], []>} : vector<8x72xbf16>, vector<72x128xbf16>, vector<8x128xf32> -> vector<8x128xf32>
    %cst_67 = arith.constant 0.000000e+00 : f32
    %54 = vector.broadcast %cst_67 : f32 to vector<8x128xf32>
    %55 = arith.cmpf ogt, %53, %54 : vector<8x128xf32>
    %cst_68 = arith.constant 2.000000e-01 : f32
    %56 = vector.broadcast %cst_68 : f32 to vector<8x128xf32>
    %57 = arith.mulf %56, %53 : vector<8x128xf32>
    %58 = arith.select %55, %53, %57 : vector<8x128xi1>, vector<8x128xf32>
    %59 = arith.truncf %58 : vector<8x128xf32> to vector<8x128xbf16>
    %c0_69 = arith.constant 0 : index
    %c0_70 = arith.constant 0 : index
    %c0_71 = arith.constant 0 : index
    %60 = vector.load %arg5[%c0_69, %c0_70, %c0_71] : memref<1x8x128xbf16, #tpu.memory_space<vmem>>, vector<1x8x128xbf16>
    %61 = vector.shape_cast %60 : vector<1x8x128xbf16> to vector<8x128xbf16>
    %62 = vector.shape_cast %59 : vector<8x128xbf16> to vector<1x8x128xbf16>
    tpu.vector_store %arg5[%c0_69, %c0_70, %c0_71], %62 {strides = array<i32>} : memref<1x8x128xbf16, #tpu.memory_space<vmem>>, vector<1x8x128xbf16>,
    return
  }
  func.func @transform_0(%arg0: i32, %arg1: i32) -> (i32, i32, i32) {
    %c0_i32 = arith.constant 0 : i32
    %c0_i32_0 = arith.constant 0 : i32
    return %arg0, %c0_i32, %arg1 : i32, i32, i32
  }
  func.func @transform_1(%arg0: i32, %arg1: i32) -> (i32, i32, i32) {
    %c1_i32 = arith.constant 1 : i32
    %0 = arith.addi %arg1, %c1_i32 : i32
    %c0_i32 = arith.constant 0 : i32
    %c0_i32_0 = arith.constant 0 : i32
    return %arg0, %c0_i32, %0 : i32, i32, i32
  }
  func.func @transform_2(%arg0: i32, %arg1: i32) -> (i32, i32) {
    %c0_i32 = arith.constant 0 : i32
    %c0_i32_0 = arith.constant 0 : i32
    %c0_i32_1 = arith.constant 0 : i32
    return %c0_i32, %c0_i32_0 : i32, i32
  }
  func.func @transform_3(%arg0: i32, %arg1: i32) -> (i32, i32, i32) {
    %c0_i32 = arith.constant 0 : i32
    %c0_i32_0 = arith.constant 0 : i32
    return %arg0, %c0_i32, %arg1 : i32, i32, i32
  }
}

</mosaic_0001>

<llo_original>
// kernel: cross_attention_forward.4
$region0: #{cross_attention_forward.4}
  #allocation0 [shape = 'u32[]', space=smem, size = 0x4, offset = 0x4, fixed_abs, tag = 'smem constant byte address 0x4 - core index']
  #allocation1 [shape = 'u32[144,128]{1,0:T(1,128)}', space=vmem, size = 0x12000, scoped, tag = 'internal scratch']
  #allocation2 [shape = 'f32[1,64]{1,0:T(1,128)}', space=vmem, size = 0x200, scoped, tag = 'scratch operand']
  #allocation3 [shape = 'f32[1,64]{1,0:T(1,128)}', space=vmem, size = 0x200, scoped, tag = 'scratch operand']
  #allocation4 [shape = 'f32[8,64]{1,0:T(8,128)}', space=vmem, size = 0x1000, scoped, tag = 'scratch operand']
  %s0 = inlined_call_operand.vmem [shape: bf16[2,64,24], index: 0, kind: input, shape index: {}]
  %s1 = inlined_call_operand.vmem [shape: f32[2,24,64], index: 1, kind: input, shape index: {}]
  %s2 = inlined_call_operand.vmem [shape: bf16[2,8,64], index: 2, kind: input, shape index: {}]
  %s3 = inlined_call_operand.vmem [shape: bf16[2,8,64], index: 3, kind: output, shape index: {}]
  %s4 = sld [smem:[#allocation0]]
  $region53: #{cross_attention_forward.4} parent=0
    _
  %s6 = ssub.s32 1, %s4
  %s7 = scalar_select 0, %s6, %s4
  loop: start=0, step=1, limit=4
  $region2: #{cross_attention_forward.4} parent=0 // loop_pre_header
    _
  $region3: #{cross_attention_forward.4} parent=0 // loop_header
    %s9 = sphi 0, %s13
    %p10 = scmp.ge.s32.totalorder %s9, 4
    %s16 = sphi 0, %s35
    %s17 = sphi 0, %s31
    %s18 = sphi 0, %s27
    %s19 = sphi 0, %s16
    %s20 = sphi 0, %s17
    %s21 = sphi 0, %s18
    %s22 = sphi 0, %s19
    %s23 = sphi 0, %s20
    %s24 = sphi 0, %s21
    %s40 = sphi 0, %s42
    %s43 = sphi 0, %s40
    %s44 = sphi 0, %s43
    %s60 = sphi 0, %s44
    %s68 = sphi 0, %s70
    %s71 = sphi 0, %s68
    %s72 = sphi 0, %s71
    %s88 = sphi 0, %s72
    %s96 = sphi 0, %s98
    %s99 = sphi 0, %s96
    %s100 = sphi 0, %s99
    %s116 = sphi 0, %s100
    %s124 = sphi 0, %s126
    %s127 = sphi 0, %s124
    %s128 = sphi 0, %s127
    %s144 = sphi 0, %s128
  $region4: #{cross_attention_forward.4} parent=0 // loop_header_branch
    %12 = sbr.rel (%p10) target = $region8
  $region5: #{cross_attention_forward.4} parent=0 // loop_body
    %s14 = ssub.s32 %s9, 1
    %s15 = ssub.s32 %s9, 2
    %s25 = sadd.s32 1, %s18
    %p26 = scmp.ge.s32.totalorder %s25, 1
    %s27 = scalar_select %p26, 0, %s25
    %s28 = sadd.s32 1, %s17
    %s29 = scalar_select %p26, %s28, %s17
    %p30 = scmp.ge.s32.totalorder %s29, 1
    %s31 = scalar_select %p30, 0, %s29
    %s32 = sadd.s32 1, %s16
    %s33 = scalar_select %p30, %s32, %s16
    %p34 = scmp.ge.s32.totalorder %s33, 2
    %s35 = scalar_select %p34, 0, %s33
    %s36 = ssub.s32 %s16, %s35
    %s37 = ssub.s32 %s18, %s27
    %s38 = sor.u32 %s36, %s37
    %p39 = scmp.eq.s32.totalorder %s38, 0
    %s41 = sadd.s32 %s40, 1
    %s42 = scalar_select %p39, %s40, %s41
    %p45 = pneg %p39
    %p46 = scmp.eq.s32.totalorder %s9, 1
    %p47 = por %p45, %p46
    %p48 = scmp.ne.s32.totalorder %s40, %s43
    %p49 = scmp.eq.s32.totalorder %s9, 0
    %p50 = por %p48, %p49
    %p51 = scmp.ne.s32.totalorder %s40, %s43
    %p52 = scmp.eq.s32.totalorder %s14, 1
    %p53 = por %p51, %p52
    %p54 = scmp.ne.s32.totalorder %s43, %s44
    %p55 = scmp.eq.s32.totalorder %s14, 0
    %p56 = por %p54, %p55
    %p57 = scmp.ne.s32.totalorder %s43, %s44
    %p58 = scmp.eq.s32.totalorder %s15, 1
    %p59 = por %p57, %p58
    %p61 = scmp.ne.s32.totalorder %s44, %s60
    %p62 = scmp.eq.s32.totalorder %s15, 0
    %p63 = por %p61, %p62
    %s64 = ssub.s32 %s16, %s35
    %s65 = ssub.s32 %s17, %s31
    %s66 = sor.u32 %s64, %s65
    %p67 = scmp.eq.s32.totalorder %s66, 0
    %s69 = sadd.s32 %s68, 1
    %s70 = scalar_select %p67, %s68, %s69
    %p73 = pneg %p67
    %p74 = scmp.eq.s32.totalorder %s9, 1
    %p75 = por %p73, %p74
    %p76 = scmp.ne.s32.totalorder %s68, %s71
    %p77 = scmp.eq.s32.totalorder %s9, 0
    %p78 = por %p76, %p77
    %p79 = scmp.ne.s32.totalorder %s68, %s71
    %p80 = scmp.eq.s32.totalorder %s14, 1
    %p81 = por %p79, %p80
    %p82 = scmp.ne.s32.totalorder %s71, %s72
    %p83 = scmp.eq.s32.totalorder %s14, 0
    %p84 = por %p82, %p83
    %p85 = scmp.ne.s32.totalorder %s71, %s72
    %p86 = scmp.eq.s32.totalorder %s15, 1
    %p87 = por %p85, %p86
    %p89 = scmp.ne.s32.totalorder %s72, %s88
    %p90 = scmp.eq.s32.totalorder %s15, 0
    %p91 = por %p89, %p90
    %s92 = ssub.s32 %s16, %s35
    %s93 = ssub.s32 %s18, %s27
    %s94 = sor.u32 %s92, %s93
    %p95 = scmp.eq.s32.totalorder %s94, 0
    %s97 = sadd.s32 %s96, 1
    %s98 = scalar_select %p95, %s96, %s97
    %p101 = pneg %p95
    %p102 = scmp.eq.s32.totalorder %s9, 1
    %p103 = por %p101, %p102
    %p104 = scmp.ne.s32.totalorder %s96, %s99
    %p105 = scmp.eq.s32.totalorder %s9, 0
    %p106 = por %p104, %p105
    %p107 = scmp.ne.s32.totalorder %s96, %s99
    %p108 = scmp.eq.s32.totalorder %s14, 1
    %p109 = por %p107, %p108
    %p110 = scmp.ne.s32.totalorder %s99, %s100
    %p111 = scmp.eq.s32.totalorder %s14, 0
    %p112 = por %p110, %p111
    %p113 = scmp.ne.s32.totalorder %s99, %s100
    %p114 = scmp.eq.s32.totalorder %s15, 1
    %p115 = por %p113, %p114
    %p117 = scmp.ne.s32.totalorder %s100, %s116
    %p118 = scmp.eq.s32.totalorder %s15, 0
    %p119 = por %p117, %p118
    %s120 = ssub.s32 %s16, %s35
    %s121 = ssub.s32 %s17, %s31
    %s122 = sor.u32 %s120, %s121
    %p123 = scmp.eq.s32.totalorder %s122, 0
    %s125 = sadd.s32 %s124, 1
    %s126 = scalar_select %p123, %s124, %s125
    %p129 = pneg %p123
    %p130 = scmp.eq.s32.totalorder %s9, 1
    %p131 = por %p129, %p130
    %p132 = scmp.ne.s32.totalorder %s124, %s127
    %p133 = scmp.eq.s32.totalorder %s9, 0
    %p134 = por %p132, %p133
    %p135 = scmp.ne.s32.totalorder %s124, %s127
    %p136 = scmp.eq.s32.totalorder %s14, 1
    %p137 = por %p135, %p136
    %p138 = scmp.ne.s32.totalorder %s127, %s128
    %p139 = scmp.eq.s32.totalorder %s14, 0
    %p140 = por %p138, %p139
    %p141 = scmp.ne.s32.totalorder %s127, %s128
    %p142 = scmp.eq.s32.totalorder %s15, 1
    %p143 = por %p141, %p142
    %p145 = scmp.ne.s32.totalorder %s128, %s144
    %p146 = scmp.eq.s32.totalorder %s15, 0
    %p147 = por %p145, %p146
    %p148 = scmp.le.s32.totalorder 1, %s9
    %p149 = scmp.lt.s32.totalorder %s9, 3
    %p150 = pnand %p148, %p149
    %p151 = pneg %p150
    // Predicated region
    $region9: #{cross_attention_forward.4} parent=5 // pred_check
      _
    $region10: #{cross_attention_forward.4} parent=5 // pred_check_branch
      %153 = sbr.rel (%p150) target = $region12
    $region11: #{cross_attention_forward.4} parent=5 // pred_region
      %s154 = ssub.s32 %s9, 1
    $region12: #{cross_attention_forward.4} parent=5 // pred_fallthru
      _
    %p155 = scmp.lt.s32.totalorder %s9, 2
    // Predicated region
    $region13: #{cross_attention_forward.4} parent=5 // pred_check
      %p156 = pneg %p155
    $region14: #{cross_attention_forward.4} parent=5 // pred_check_branch
      %158 = sbr.rel (%p156) target = $region16
    $region15: #{cross_attention_forward.4} parent=5 // pred_region
      // Predicated region
      $region17: #{cross_attention_forward.4} parent=15 // pred_check
        %p159 = pneg %p50
      $region18: #{cross_attention_forward.4} parent=15 // pred_check_branch
        %161 = sbr.rel (%p159) target = $region20
      $region19: #{cross_attention_forward.4} parent=15 // pred_region
        %s162 = smul.u32 8, %s18
        %p163 = scmp.lt.s32.totalorder %s16, 1
        %s164 = scalar_select %p163, %s16, 1
        %p165 = scmp.lt.s32.totalorder %s162, 7
        %s166 = scalar_select %p165, %s162, 7
        %s167 = smul.addr %s164, 8
        %s168 = sadd.s32 %s166, %s167
        %s169 = smul.addr %s168, 4
        %s170 = scalar_lea.vmem %s0, %s169
        %s171 = smul.u32 8, %s18
      $region20: #{cross_attention_forward.4} parent=15 // pred_fallthru
        _
      // Predicated region
      $region21: #{cross_attention_forward.4} parent=15 // pred_check
        %p172 = pneg %p78
      $region22: #{cross_attention_forward.4} parent=15 // pred_check_branch
        %174 = sbr.rel (%p172) target = $region24
      $region23: #{cross_attention_forward.4} parent=15 // pred_region
        %p175 = scmp.lt.s32.totalorder %s16, 1
        %s176 = scalar_select %p175, %s16, 1
        %p177 = scmp.lt.s32.totalorder %s17, 0
        %s178 = scalar_select %p177, %s17, 0
        %s179 = smul.addr %s176, 3
        %s180 = sadd.s32 %s178, %s179
        %s181 = smul.addr %s180, 8
        %s182 = scalar_lea.vmem %s1, %s181
      $region24: #{cross_attention_forward.4} parent=15 // pred_fallthru
        _
      // Predicated region
      $region25: #{cross_attention_forward.4} parent=15 // pred_check
        %p183 = pneg %p106
      $region26: #{cross_attention_forward.4} parent=15 // pred_check_branch
        %185 = sbr.rel (%p183) target = $region28
      $region27: #{cross_attention_forward.4} parent=15 // pred_region
        %p186 = scmp.lt.s32.totalorder %s16, 1
        %s187 = scalar_select %p186, %s16, 1
        %p188 = scmp.lt.s32.totalorder %s18, 0
        %s189 = scalar_select %p188, %s18, 0
        %s190 = sadd.s32 %s189, %s187
        %s191 = smul.addr %s190, 4
        %s192 = scalar_lea.vmem %s2, %s191
      $region28: #{cross_attention_forward.4} parent=15 // pred_fallthru
        _
    $region16: #{cross_attention_forward.4} parent=5 // pred_fallthru
      _
    %p193 = scmp.le.s32.totalorder 1, %s9
    %p194 = scmp.lt.s32.totalorder %s9, 3
    %p195 = pnand %p193, %p194
    %p196 = pneg %p195
    // Predicated region
    $region29: #{cross_attention_forward.4} parent=5 // pred_check
      _
    $region30: #{cross_attention_forward.4} parent=5 // pred_check_branch
      %198 = sbr.rel (%p195) target = $region32
    $region31: #{cross_attention_forward.4} parent=5 // pred_region
      %s199 = ssub.s32 %s9, 1
      %s200 = smul.u32 8, %s21
      %p201 = scmp.lt.s32.totalorder %s19, 1
      %s202 = scalar_select %p201, %s19, 1
      %p203 = scmp.lt.s32.totalorder %s200, 7
      %s204 = scalar_select %p203, %s200, 7
      %s205 = smul.addr %s202, 8
      %s206 = sadd.s32 %s204, %s205
      %s207 = smul.addr %s206, 4
      %s208 = scalar_lea.vmem %s0, %s207
      %p209 = pneg %p56
      %p210 = pneg %p53
      %p211 = scmp.lt.s32.totalorder %s19, 1
      %s212 = scalar_select %p211, %s19, 1
      %p213 = scmp.lt.s32.totalorder %s20, 0
      %s214 = scalar_select %p213, %s20, 0
      %s215 = smul.addr %s212, 3
      %s216 = sadd.s32 %s214, %s215
      %s217 = smul.addr %s216, 8
      %s218 = scalar_lea.vmem %s1, %s217
      %p219 = pneg %p84
      %p220 = pneg %p81
      %p221 = scmp.lt.s32.totalorder %s19, 1
      %s222 = scalar_select %p221, %s19, 1
      %p223 = scmp.lt.s32.totalorder %s21, 0
      %s224 = scalar_select %p223, %s21, 0
      %s225 = sadd.s32 %s224, %s222
      %s226 = smul.addr %s225, 4
      %s227 = scalar_lea.vmem %s2, %s226
      %p228 = pneg %p112
      %p229 = pneg %p109
      %p230 = pneg %p140
      %p231 = pneg %p137
      %p232 = scmp.lt.s32.totalorder %s19, 1
      %s233 = scalar_select %p232, %s19, 1
      %p234 = scmp.lt.s32.totalorder %s20, 0
      %s235 = scalar_select %p234, %s20, 0
      %s236 = sadd.s32 %s235, %s233
      %s237 = smul.addr %s236, 4
      %s238 = scalar_lea.vmem %s3, %s237
      %s239 = smul.u32 8, %s21
      %p240 = scmp.lt.s32.totalorder %s19, 1
      %s241 = scalar_select %p240, %s19, 1
      %p242 = scmp.lt.s32.totalorder %s239, 7
      %s243 = scalar_select %p242, %s239, 7
      %s244 = smul.addr %s241, 8
      %s245 = sadd.s32 %s243, %s244
      %s246 = smul.addr %s245, 4
      %s247 = scalar_lea.vmem %s0, %s246
      %s248 = smul.u32 8, %s21
      %p249 = scmp.lt.s32.totalorder %s19, 1
      %s250 = scalar_select %p249, %s19, 1
      %p251 = scmp.lt.s32.totalorder %s20, 0
      %s252 = scalar_select %p251, %s20, 0
      %s253 = smul.addr %s250, 3
      %s254 = sadd.s32 %s252, %s253
      %s255 = smul.addr %s254, 8
      %s256 = scalar_lea.vmem %s1, %s255
      %p257 = scmp.lt.s32.totalorder %s19, 1
      %s258 = scalar_select %p257, %s19, 1
      %p259 = scmp.lt.s32.totalorder %s21, 0
      %s260 = scalar_select %p259, %s21, 0
      %s261 = sadd.s32 %s260, %s258
      %s262 = smul.addr %s261, 4
      %s263 = scalar_lea.vmem %s2, %s262
      %p264 = scmp.lt.s32.totalorder %s19, 1
      %s265 = scalar_select %p264, %s19, 1
      %p266 = scmp.lt.s32.totalorder %s20, 0
      %s267 = scalar_select %p266, %s20, 0
      %s268 = sadd.s32 %s267, %s265
      %s269 = smul.addr %s268, 4
      %s270 = scalar_lea.vmem %s3, %s269
      %p272 = scmp.eq.s32.totalorder %s21, 0
      // Predicated region
      $region33: #{cross_attention_forward.4} parent=31 // pred_check
        %p273 = pneg %p272
      $region34: #{cross_attention_forward.4} parent=31 // pred_check_branch
        %275 = sbr.rel (%p273) target = $region36
      $region35: #{cross_attention_forward.4} parent=31 // pred_region
        %vm276 = vcmask 516096
        %277 = vst.msk [vmem:[#allocation2] sm:$0x1] %vm276, -inf
        %278 = vst.msk [vmem:[#allocation3] sm:$0x1] %vm276, 0.0
        %vm279 = vcmask 523264
        %280 = vst.msk [vmem:[#allocation4] sm:$0xff] %vm279, 0.0
      $region36: #{cross_attention_forward.4} parent=31 // pred_fallthru
        _
      %v281 = vld [vmem:[%s256] sm:$0xff]
      %v282 = vld [vmem:[%s256 + $0x8] sm:$0xff]
      %v283 = vld [vmem:[%s256 + $0x10] sm:$0xff]
      %v284 = vmul.f32 %v281, 0.20412415
      %v285 = vmul.f32 %v282, 0.20412415
      %v286 = vmul.f32 %v283, 0.20412415
      %v287 = vpack.c.bf16 %v285, %v284
      %v288 = vpack.c.bf16 %v286, %v286
      %v289 = vld [vmem:[%s247] sm:$0xf]
      %v290 = vld [vmem:[%s247 + $0x4] sm:$0xf]
      %v291 = vld [vmem:[%s247 + $0x8] sm:$0xf]
      %v292 = vld [vmem:[%s247 + $0xc] sm:$0xf]
      %v293 = vld [vmem:[%s247 + $0x10] sm:$0xf]
      %v294 = vld [vmem:[%s247 + $0x14] sm:$0xf]
      %v295 = vld [vmem:[%s247 + $0x18] sm:$0xf]
      %v296 = vld [vmem:[%s247 + $0x1c] sm:$0xf]
      %v305 = vunpack.c.l.b16 %v289
      %v306 = vunpack.c.l.b16 %v290
      %v307 = vunpack.c.l.b16 %v291
      %v308 = vunpack.c.l.b16 %v292
      %v309 = vunpack.c.l.b16 %v293
      %v310 = vunpack.c.l.b16 %v294
      %v311 = vunpack.c.l.b16 %v295
      %v312 = vunpack.c.l.b16 %v296
      %v313 = vpack.c.b16 %v306, %v305
      %v314 = vpack.c.b16 %v308, %v307
      %v315 = vpack.c.b16 %v310, %v309
      %v316 = vpack.c.b16 %v312, %v311
      %vm317 = vcmask 195584
      %v319 = vsel %vm317, %v313, 0
      %v322 = vsel %vm317, %v314, 0
      %v325 = vsel %vm317, %v315, 0
      %v328 = vsel %vm317, %v316, 0
      %vm330 = vcmask 1043456
      %v332 = vsel %vm330, %v288, 0
      %334 = vmatprep.subr.bf16.mxu0 0
      %335 = vmatpush1.bf16.msra.mxu0 %v287
      %336 = vmatprep.subr.bf16.mxu0 0
      %337 = vmatpush1.bf16.msra.mxu0 %v332
      %338 = vmatprep.subr.bf16.mxu0 0
      %339 = vmatpush1.bf16.msra.mxu0 0
      %340 = vmatprep.subr.bf16.mxu0 0
      %341 = vmatpush1.bf16.msra.mxu0 0
      %342 = vmatprep.subr.bf16.mxu0 0
      %343 = vmatpush1.bf16.msra.mxu0 0
      %344 = vmatprep.subr.bf16.mxu0 0
      %345 = vmatpush1.bf16.msra.mxu0 0
      %346 = vmatprep.subr.bf16.mxu0 0
      %347 = vmatpush1.bf16.msra.mxu0 0
      %348 = vmatprep.subr.bf16.mxu0 0
      %349 = vmatpush1.bf16.msra.mxu0 0
      %350 = vmatprep.subr.bf16.mxu0 0
      %351 = vmatpush1.bf16.msra.mxu0 0
      %352 = vmatprep.subr.bf16.mxu0 0
      %353 = vmatpush1.bf16.msra.mxu0 0
      %354 = vmatprep.subr.bf16.mxu0 0
      %355 = vmatpush1.bf16.msra.mxu0 0
      %356 = vmatprep.subr.bf16.mxu0 0
      %357 = vmatpush1.bf16.msra.mxu0 0
      %358 = vmatprep.subr.bf16.mxu0 0
      %359 = vmatpush1.bf16.msra.mxu0 0
      %360 = vmatprep.subr.bf16.mxu0 0
      %361 = vmatpush1.bf16.msra.mxu0 0
      %362 = vmatprep.subr.bf16.mxu0 0
      %363 = vmatpush1.bf16.msra.mxu0 0
      %364 = vmatprep.subr.bf16.mxu0 0
      %365 = vmatpush1.bf16.msra.mxu0 0
      %366 = vmatprep.mubr.bf16.mxu0 0
      %367 = vmatmul.mubr.bf16.gmra.mrb[0].mxu0 %v319
      %v368 = vpop.f32.mrb[0].mxu0
      %v369 = vadd.f32 0.0, %v368
      %v370 = vpop.f32.mrb[0].mxu0
      %v371 = vpop.f32.mrb[0].mxu0
      %v372 = vadd.f32 0.0, %v371
      %v373 = vpop.f32.mrb[0].mxu0
      %374 = vmatprep.mubr.bf16.mxu0 0
      %375 = vmatmul.mubr.bf16.gmra.mrb[0].mxu0 %v322
      %v376 = vpop.f32.mrb[0].mxu0
      %v377 = vadd.f32 0.0, %v376
      %v378 = vpop.f32.mrb[0].mxu0
      %v379 = vpop.f32.mrb[0].mxu0
      %v380 = vadd.f32 0.0, %v379
      %v381 = vpop.f32.mrb[0].mxu0
      %382 = vmatprep.mubr.bf16.mxu0 0
      %383 = vmatmul.mubr.bf16.gmra.mrb[0].mxu0 %v325
      %v384 = vpop.f32.mrb[0].mxu0
      %v385 = vadd.f32 0.0, %v384
      %v386 = vpop.f32.mrb[0].mxu0
      %v387 = vpop.f32.mrb[0].mxu0
      %v388 = vadd.f32 0.0, %v387
      %v389 = vpop.f32.mrb[0].mxu0
      %390 = vmatprep.mubr.bf16.mxu0 0
      %391 = vmatmul.mubr.bf16.gmra.mrb[0].mxu0 %v328
      %v392 = vpop.f32.mrb[0].mxu0
      %v393 = vadd.f32 0.0, %v392
      %v394 = vpop.f32.mrb[0].mxu0
      %v395 = vpop.f32.mrb[0].mxu0
      %v396 = vadd.f32 0.0, %v395
      %v397 = vpop.f32.mrb[0].mxu0
      %398 = vdwg.mxu0
      %v399 = vld [vmem:[#allocation2] sm:$0x1]
      %vm400 = vcmask 523264
      %v401 = vsel %vm400, %v369, -inf
      %v402 = vsel %vm400, %v372, -inf
      %v403 = vsel %vm400, %v377, -inf
      %v404 = vsel %vm400, %v380, -inf
      %v405 = vsel %vm400, %v385, -inf
      %v406 = vmax.f32 %v401, %v405
      %v407 = vsel %vm400, %v388, -inf
      %v408 = vmax.f32 %v402, %v407
      %v409 = vsel %vm400, %v393, -inf
      %v410 = vmax.f32 %v403, %v409
      %v411 = vsel %vm400, %v396, -inf
      %v412 = vmax.f32 %v404, %v411
      %v413 = vmax.f32 %v406, %v408
      %v414 = vmax.f32 %v410, %v412
      %v415 = vmax.f32 %v413, %v414
      %v416 = vrot.slane %v415, 4
      %v417 = vmax.f32 %v415, %v416
      %v418 = vrot.slane %v417, 2
      %v419 = vmax.f32 %v417, %v418
      %v420 = vrot.slane %v419, 1
      %v421 = vmax.f32 %v419, %v420
      %v422 = vmax.f32 %v399, %v421
      %v423 = vsub.f32 %v399, %v422
      %v424 = vmul.f32 %v423, 1.442695
      %v425 = vpow.pop %v424
      %v427 = vlaneseq
      %v428 = vshrl.u32 %v427, 7
      %v429 = vsub.s32 0, %v428
      %v430 = vrot.slane %v422, %v429
      %v432 = vsub.f32 %v369, %v430
      %v433 = vsub.f32 %v372, %v430
      %v434 = vsub.f32 %v377, %v430
      %v435 = vsub.f32 %v380, %v430
      %v436 = vsub.f32 %v385, %v430
      %v437 = vsub.f32 %v388, %v430
      %v438 = vsub.f32 %v393, %v430
      %v439 = vsub.f32 %v396, %v430
      %v440 = vmul.f32 %v432, 1.442695
      %v441 = vpow.pop %v440
      %v442 = vmul.f32 %v433, 1.442695
      %v443 = vpow.pop %v442
      %v444 = vmul.f32 %v434, 1.442695
      %v445 = vpow.pop %v444
      %v446 = vmul.f32 %v435, 1.442695
      %v447 = vpow.pop %v446
      %v448 = vmul.f32 %v436, 1.442695
      %v449 = vpow.pop %v448
      %v450 = vmul.f32 %v437, 1.442695
      %v451 = vpow.pop %v450
      %v452 = vmul.f32 %v438, 1.442695
      %v453 = vpow.pop %v452
      %v454 = vmul.f32 %v439, 1.442695
      %v455 = vpow.pop %v454
      %v456 = vld [vmem:[#allocation3] sm:$0x1]
      %v457 = vmul.f32 %v425, %v456
      %v458 = vsel %vm400, %v441, 0.0
      %v459 = vsel %vm400, %v443, 0.0
      %v460 = vadd.f32 %v458, %v459
      %v461 = vsel %vm400, %v445, 0.0
      %v462 = vadd.f32 %v460, %v461
      %v463 = vsel %vm400, %v447, 0.0
      %v464 = vadd.f32 %v462, %v463
      %v465 = vsel %vm400, %v449, 0.0
      %v466 = vadd.f32 %v464, %v465
      %v467 = vsel %vm400, %v451, 0.0
      %v468 = vadd.f32 %v466, %v467
      %v469 = vsel %vm400, %v453, 0.0
      %v470 = vadd.f32 %v468, %v469
      %v471 = vsel %vm400, %v455, 0.0
      %v472 = vadd.f32 %v470, %v471
      %v473 = vrot.slane %v472, 4
      %v474 = vadd.f32 %v472, %v473
      %v475 = vrot.slane %v474, 2
      %v476 = vadd.f32 %v474, %v475
      %v477 = vrot.slane %v476, 1
      %v478 = vadd.f32 %v476, %v477
      %v479 = vadd.f32 %v457, %v478
      %vm480 = vcmask 516096
      %481 = vst.msk [vmem:[#allocation3] sm:$0x1] %vm480, %v479
      %v482 = vld [vmem:[%s263] sm:$0xf]
      %v483 = vpack.c.bf16 %v443, %v441
      %v484 = vpack.c.bf16 %v447, %v445
      %v485 = vpack.c.bf16 %v451, %v449
      %v486 = vpack.c.bf16 %v455, %v453
      %v488 = vsel %vm400, %v482, 0
      %490 = vmatprep.subr.bf16.mxu0 0
      %491 = vmatpush1.bf16.msra.mxu0 %v483
      %492 = vmatprep.subr.bf16.mxu0 0
      %493 = vmatpush1.bf16.msra.mxu0 %v484
      %494 = vmatprep.subr.bf16.mxu0 0
      %495 = vmatpush1.bf16.msra.mxu0 %v485
      %496 = vmatprep.subr.bf16.mxu0 0
      %497 = vmatpush1.bf16.msra.mxu0 %v486
      %498 = vmatprep.subr.bf16.mxu0 0
      %499 = vmatpush1.bf16.msra.mxu0 0
      %500 = vmatprep.subr.bf16.mxu0 0
      %501 = vmatpush1.bf16.msra.mxu0 0
      %502 = vmatprep.subr.bf16.mxu0 0
      %503 = vmatpush1.bf16.msra.mxu0 0
      %504 = vmatprep.subr.bf16.mxu0 0
      %505 = vmatpush1.bf16.msra.mxu0 0
      %506 = vmatprep.subr.bf16.mxu0 0
      %507 = vmatpush1.bf16.msra.mxu0 0
      %508 = vmatprep.subr.bf16.mxu0 0
      %509 = vmatpush1.bf16.msra.mxu0 0
      %510 = vmatprep.subr.bf16.mxu0 0
      %511 = vmatpush1.bf16.msra.mxu0 0
      %512 = vmatprep.subr.bf16.mxu0 0
      %513 = vmatpush1.bf16.msra.mxu0 0
      %514 = vmatprep.subr.bf16.mxu0 0
      %515 = vmatpush1.bf16.msra.mxu0 0
      %516 = vmatprep.subr.bf16.mxu0 0
      %517 = vmatpush1.bf16.msra.mxu0 0
      %518 = vmatprep.subr.bf16.mxu0 0
      %519 = vmatpush1.bf16.msra.mxu0 0
      %520 = vmatprep.subr.bf16.mxu0 0
      %521 = vmatpush1.bf16.msra.mxu0 0
      %522 = vmatprep.mubr.bf16.mxu0 0
      %523 = vmatmul.mubr.bf16.gmra.mrb[0].mxu0 %v488
      %v524 = vpop.f32.mrb[0].mxu0
      %v525 = vadd.f32 0.0, %v524
      %v526 = vpop.f32.mrb[0].mxu0
      %v527 = vpop.f32.mrb[0].mxu0
      %v528 = vpop.f32.mrb[0].mxu0
      %529 = vdwg.mxu0
      %v530 = vld [vmem:[#allocation4] sm:$0xff]
      %v532 = vlaneseq
      %v533 = vshrl.u32 %v532, 7
      %v534 = vsub.s32 0, %v533
      %v535 = vrot.slane %v425, %v534
      %v537 = vmul.f32 %v535, %v530
      %v538 = vadd.f32 %v537, %v525
      %539 = vst.msk [vmem:[#allocation4] sm:$0xff] %vm400, %v538
      %540 = vst.msk [vmem:[#allocation2] sm:$0x1] %vm480, %v422
      // Predicated region
      $region37: #{cross_attention_forward.4} parent=31 // pred_check
        %p541 = pneg %p272
      $region38: #{cross_attention_forward.4} parent=31 // pred_check_branch
        %543 = sbr.rel (%p541) target = $region40
      $region39: #{cross_attention_forward.4} parent=31 // pred_region
        %v544 = vld [vmem:[#allocation3] sm:$0x1]
        %v545 = vrcp.pop %v544
        %v546 = vld [vmem:[#allocation4] sm:$0xff]
        %v548 = vlaneseq
        %v549 = vshrl.u32 %v548, 7
        %v550 = vsub.s32 0, %v549
        %v551 = vrot.slane %v545, %v550
        %v553 = vmul.f32 %v546, %v551
        %v554 = vpack.c.bf16 %v553, %v553
        %vm555 = vcmask 519168
        %556 = vst.msk [vmem:[%s270] sm:$0xf] %vm555, %v554
      $region40: #{cross_attention_forward.4} parent=31 // pred_fallthru
        _
      %p557 = scmp.lt.s32.totalorder %s19, 1
      %s558 = scalar_select %p557, %s19, 1
      %p559 = scmp.lt.s32.totalorder %s20, 0
      %s560 = scalar_select %p559, %s20, 0
      %s561 = sadd.s32 %s560, %s558
      %s562 = smul.addr %s561, 4
      %s563 = scalar_lea.vmem %s3, %s562
      // Predicated region
      $region41: #{cross_attention_forward.4} parent=31 // pred_check
        %p564 = pneg %p137
      $region42: #{cross_attention_forward.4} parent=31 // pred_check_branch
        %566 = sbr.rel (%p564) target = $region44
      $region43: #{cross_attention_forward.4} parent=31 // pred_region
        _
      $region44: #{cross_attention_forward.4} parent=31 // pred_fallthru
        _
    $region32: #{cross_attention_forward.4} parent=5 // pred_fallthru
      _
    %p567 = scmp.le.s32.totalorder 2, %s9
    // Predicated region
    $region45: #{cross_attention_forward.4} parent=5 // pred_check
      %p568 = pneg %p567
    $region46: #{cross_attention_forward.4} parent=5 // pred_check_branch
      %570 = sbr.rel (%p568) target = $region48
    $region47: #{cross_attention_forward.4} parent=5 // pred_region
      %s571 = ssub.s32 %s9, 2
      // Predicated region
      $region49: #{cross_attention_forward.4} parent=47 // pred_check
        %p572 = pneg %p143
      $region50: #{cross_attention_forward.4} parent=47 // pred_check_branch
        %574 = sbr.rel (%p572) target = $region52
      $region51: #{cross_attention_forward.4} parent=47 // pred_region
        %p575 = scmp.lt.s32.totalorder %s22, 1
        %s576 = scalar_select %p575, %s22, 1
        %p577 = scmp.lt.s32.totalorder %s23, 0
        %s578 = scalar_select %p577, %s23, 0
        %s579 = sadd.s32 %s578, %s576
        %s580 = smul.addr %s579, 4
        %s581 = scalar_lea.vmem %s3, %s580
      $region52: #{cross_attention_forward.4} parent=47 // pred_fallthru
        _
    $region48: #{cross_attention_forward.4} parent=5 // pred_fallthru
      _
  $region6: #{cross_attention_forward.4} parent=0 // loop_footer
    %s13 = sadd.s32 1, %s9
  $region7: #{cross_attention_forward.4} parent=0 // loop_footer_branch
    %8 = sbr.rel target = $region3
  $region8: #{cross_attention_forward.4} parent=0 // loop_exit
    _

// kernel: cross_attention_forward.5
$region0: #{cross_attention_forward.5}
  #allocation0 [shape = 'u32[]', space=smem, size = 0x4, offset = 0x4, fixed_abs, tag = 'smem constant byte address 0x4 - core index']
  #allocation1 [shape = 'u32[144,128]{1,0:T(1,128)}', space=vmem, size = 0x12000, scoped, tag = 'internal scratch']
  #allocation2 [shape = 'bf16[72,128]{1,0:T(8,128)(2,1)}', space=vmem, size = 0x4800, scoped, tag = 'scratch operand']
  %s0 = inlined_call_operand.vmem [shape: bf16[2,8,162], index: 0, kind: input, shape index: {}, may-alias: {0,1}]
  %s1 = inlined_call_operand.vmem [shape: bf16[2,8,162], index: 1, kind: input, shape index: {}, may-alias: {0,1}]
  %s2 = inlined_call_operand.vmem [shape: bf16[8,72], index: 2, kind: input, shape index: {}]
  %s3 = inlined_call_operand.vmem [shape: f32[2,8,128], index: 3, kind: input, shape index: {}]
  %s4 = inlined_call_operand.vmem [shape: f32[2,8,128], index: 4, kind: output, shape index: {}]
  %s5 = sld [smem:[#allocation0]]
  $region49: #{cross_attention_forward.5} parent=0
    _
  %s7 = ssub.s32 1, %s5
  %s8 = scalar_select 0, %s7, %s5
  loop: start=0, step=1, limit=4
  $region2: #{cross_attention_forward.5} parent=0 // loop_pre_header
    _
  $region3: #{cross_attention_forward.5} parent=0 // loop_header
    %s10 = sphi 0, %s14
    %p11 = scmp.ge.s32.totalorder %s10, 4
    %s17 = sphi 0, %s29
    %s18 = sphi 0, %s25
    %s19 = sphi 0, %s17
    %s20 = sphi 0, %s18
    %s21 = sphi 0, %s19
    %s22 = sphi 0, %s20
    %s34 = sphi 0, %s36
    %s37 = sphi 0, %s34
    %s38 = sphi 0, %s37
    %s54 = sphi 0, %s38
    %s64 = sphi 0, %s66
    %s67 = sphi 0, %s64
    %s68 = sphi 0, %s67
    %s84 = sphi 0, %s68
    %s88 = sphi 0, %s88
    %s90 = sphi 0, %s88
    %s91 = sphi 0, %s90
    %s105 = sphi 0, %s91
    %s113 = sphi 0, %s115
    %s116 = sphi 0, %s113
    %s117 = sphi 0, %s116
    %s133 = sphi 0, %s117
    %s141 = sphi 0, %s143
    %s144 = sphi 0, %s141
    %s145 = sphi 0, %s144
    %s161 = sphi 0, %s145
  $region4: #{cross_attention_forward.5} parent=0 // loop_header_branch
    %13 = sbr.rel (%p11) target = $region8
  $region5: #{cross_attention_forward.5} parent=0 // loop_body
    %s15 = ssub.s32 %s10, 1
    %s16 = ssub.s32 %s10, 2
    %s23 = sadd.s32 1, %s18
    %p24 = scmp.ge.s32.totalorder %s23, 1
    %s25 = scalar_select %p24, 0, %s23
    %s26 = sadd.s32 1, %s17
    %s27 = scalar_select %p24, %s26, %s17
    %p28 = scmp.ge.s32.totalorder %s27, 2
    %s29 = scalar_select %p28, 0, %s27
    %s30 = ssub.s32 %s17, %s29
    %s31 = ssub.s32 %s18, %s25
    %s32 = sor.u32 %s30, %s31
    %p33 = scmp.eq.s32.totalorder %s32, 0
    %s35 = sadd.s32 %s34, 1
    %s36 = scalar_select %p33, %s34, %s35
    %p39 = pneg %p33
    %p40 = scmp.eq.s32.totalorder %s10, 1
    %p41 = por %p39, %p40
    %p42 = scmp.ne.s32.totalorder %s34, %s37
    %p43 = scmp.eq.s32.totalorder %s10, 0
    %p44 = por %p42, %p43
    %p45 = scmp.ne.s32.totalorder %s34, %s37
    %p46 = scmp.eq.s32.totalorder %s15, 1
    %p47 = por %p45, %p46
    %p48 = scmp.ne.s32.totalorder %s37, %s38
    %p49 = scmp.eq.s32.totalorder %s15, 0
    %p50 = por %p48, %p49
    %p51 = scmp.ne.s32.totalorder %s37, %s38
    %p52 = scmp.eq.s32.totalorder %s16, 1
    %p53 = por %p51, %p52
    %p55 = scmp.ne.s32.totalorder %s38, %s54
    %p56 = scmp.eq.s32.totalorder %s16, 0
    %p57 = por %p55, %p56
    %s58 = sadd.s32 %s18, 1
    %s59 = sadd.s32 %s25, 1
    %s60 = ssub.s32 %s17, %s29
    %s61 = ssub.s32 %s58, %s59
    %s62 = sor.u32 %s60, %s61
    %p63 = scmp.eq.s32.totalorder %s62, 0
    %s65 = sadd.s32 %s64, 1
    %s66 = scalar_select %p63, %s64, %s65
    %p69 = pneg %p63
    %p70 = scmp.eq.s32.totalorder %s10, 1
    %p71 = por %p69, %p70
    %p72 = scmp.ne.s32.totalorder %s64, %s67
    %p73 = scmp.eq.s32.totalorder %s10, 0
    %p74 = por %p72, %p73
    %p75 = scmp.ne.s32.totalorder %s64, %s67
    %p76 = scmp.eq.s32.totalorder %s15, 1
    %p77 = por %p75, %p76
    %p78 = scmp.ne.s32.totalorder %s67, %s68
    %p79 = scmp.eq.s32.totalorder %s15, 0
    %p80 = por %p78, %p79
    %p81 = scmp.ne.s32.totalorder %s67, %s68
    %p82 = scmp.eq.s32.totalorder %s16, 1
    %p83 = por %p81, %p82
    %p85 = scmp.ne.s32.totalorder %s68, %s84
    %p86 = scmp.eq.s32.totalorder %s16, 0
    %p87 = por %p85, %p86
    %s89 = sadd.s32 %s88, 1
    %p92 = scmp.eq.s32.totalorder %s10, 1
    %p93 = scmp.ne.s32.totalorder %s88, %s90
    %p94 = scmp.eq.s32.totalorder %s10, 0
    %p95 = por %p93, %p94
    %p96 = scmp.ne.s32.totalorder %s88, %s90
    %p97 = scmp.eq.s32.totalorder %s15, 1
    %p98 = por %p96, %p97
    %p99 = scmp.ne.s32.totalorder %s90, %s91
    %p100 = scmp.eq.s32.totalorder %s15, 0
    %p101 = por %p99, %p100
    %p102 = scmp.ne.s32.totalorder %s90, %s91
    %p103 = scmp.eq.s32.totalorder %s16, 1
    %p104 = por %p102, %p103
    %p106 = scmp.ne.s32.totalorder %s91, %s105
    %p107 = scmp.eq.s32.totalorder %s16, 0
    %p108 = por %p106, %p107
    %s109 = ssub.s32 %s17, %s29
    %s110 = ssub.s32 %s18, %s25
    %s111 = sor.u32 %s109, %s110
    %p112 = scmp.eq.s32.totalorder %s111, 0
    %s114 = sadd.s32 %s113, 1
    %s115 = scalar_select %p112, %s113, %s114
    %p118 = pneg %p112
    %p119 = scmp.eq.s32.totalorder %s10, 1
    %p120 = por %p118, %p119
    %p121 = scmp.ne.s32.totalorder %s113, %s116
    %p122 = scmp.eq.s32.totalorder %s10, 0
    %p123 = por %p121, %p122
    %p124 = scmp.ne.s32.totalorder %s113, %s116
    %p125 = scmp.eq.s32.totalorder %s15, 1
    %p126 = por %p124, %p125
    %p127 = scmp.ne.s32.totalorder %s116, %s117
    %p128 = scmp.eq.s32.totalorder %s15, 0
    %p129 = por %p127, %p128
    %p130 = scmp.ne.s32.totalorder %s116, %s117
    %p131 = scmp.eq.s32.totalorder %s16, 1
    %p132 = por %p130, %p131
    %p134 = scmp.ne.s32.totalorder %s117, %s133
    %p135 = scmp.eq.s32.totalorder %s16, 0
    %p136 = por %p134, %p135
    %s137 = ssub.s32 %s17, %s29
    %s138 = ssub.s32 %s18, %s25
    %s139 = sor.u32 %s137, %s138
    %p140 = scmp.eq.s32.totalorder %s139, 0
    %s142 = sadd.s32 %s141, 1
    %s143 = scalar_select %p140, %s141, %s142
    %p146 = pneg %p140
    %p147 = scmp.eq.s32.totalorder %s10, 1
    %p148 = por %p146, %p147
    %p149 = scmp.ne.s32.totalorder %s141, %s144
    %p150 = scmp.eq.s32.totalorder %s10, 0
    %p151 = por %p149, %p150
    %p152 = scmp.ne.s32.totalorder %s141, %s144
    %p153 = scmp.eq.s32.totalorder %s15, 1
    %p154 = por %p152, %p153
    %p155 = scmp.ne.s32.totalorder %s144, %s145
    %p156 = scmp.eq.s32.totalorder %s15, 0
    %p157 = por %p155, %p156
    %p158 = scmp.ne.s32.totalorder %s144, %s145
    %p159 = scmp.eq.s32.totalorder %s16, 1
    %p160 = por %p158, %p159
    %p162 = scmp.ne.s32.totalorder %s145, %s161
    %p163 = scmp.eq.s32.totalorder %s16, 0
    %p164 = por %p162, %p163
    %p165 = scmp.le.s32.totalorder 1, %s10
    %p166 = scmp.lt.s32.totalorder %s10, 3
    %p167 = pnand %p165, %p166
    %p168 = pneg %p167
    // Predicated region
    $region9: #{cross_attention_forward.5} parent=5 // pred_check
      _
    $region10: #{cross_attention_forward.5} parent=5 // pred_check_branch
      %170 = sbr.rel (%p167) target = $region12
    $region11: #{cross_attention_forward.5} parent=5 // pred_region
      %s171 = ssub.s32 %s10, 1
      // Predicated region
      $region13: #{cross_attention_forward.5} parent=11 // pred_check
        %p172 = pneg %p101
      $region14: #{cross_attention_forward.5} parent=11 // pred_check_branch
        %174 = sbr.rel (%p172) target = $region16
      $region15: #{cross_attention_forward.5} parent=11 // pred_region
        _
      $region16: #{cross_attention_forward.5} parent=11 // pred_fallthru
        _
    $region12: #{cross_attention_forward.5} parent=5 // pred_fallthru
      _
    %p175 = scmp.lt.s32.totalorder %s10, 2
    // Predicated region
    $region17: #{cross_attention_forward.5} parent=5 // pred_check
      %p176 = pneg %p175
    $region18: #{cross_attention_forward.5} parent=5 // pred_check_branch
      %178 = sbr.rel (%p176) target = $region20
    $region19: #{cross_attention_forward.5} parent=5 // pred_region
      // Predicated region
      $region21: #{cross_attention_forward.5} parent=19 // pred_check
        %p179 = pneg %p44
      $region22: #{cross_attention_forward.5} parent=19 // pred_check_branch
        %181 = sbr.rel (%p179) target = $region24
      $region23: #{cross_attention_forward.5} parent=19 // pred_region
        %p182 = scmp.lt.s32.totalorder %s17, 1
        %s183 = scalar_select %p182, %s17, 1
        %p184 = scmp.lt.s32.totalorder %s18, 1
        %s185 = scalar_select %p184, %s18, 1
        %s186 = smul.addr %s183, 2
        %s187 = sadd.s32 %s185, %s186
        %s188 = smul.addr %s187, 4
        %s189 = scalar_lea.vmem %s0, %s188
      $region24: #{cross_attention_forward.5} parent=19 // pred_fallthru
        _
      // Predicated region
      $region25: #{cross_attention_forward.5} parent=19 // pred_check
        %p190 = pneg %p74
      $region26: #{cross_attention_forward.5} parent=19 // pred_check_branch
        %192 = sbr.rel (%p190) target = $region28
      $region27: #{cross_attention_forward.5} parent=19 // pred_region
        %s193 = sadd.s32 %s18, 1
        %p194 = scmp.lt.s32.totalorder %s17, 1
        %s195 = scalar_select %p194, %s17, 1
        %p196 = scmp.lt.s32.totalorder %s193, 1
        %s197 = scalar_select %p196, %s193, 1
        %s198 = smul.addr %s195, 2
        %s199 = sadd.s32 %s197, %s198
        %s200 = smul.addr %s199, 4
        %s201 = scalar_lea.vmem %s1, %s200
        %s202 = sadd.s32 %s18, 1
      $region28: #{cross_attention_forward.5} parent=19 // pred_fallthru
        _
      // Predicated region
      $region29: #{cross_attention_forward.5} parent=19 // pred_check
        %p203 = pneg %p123
      $region30: #{cross_attention_forward.5} parent=19 // pred_check_branch
        %205 = sbr.rel (%p203) target = $region32
      $region31: #{cross_attention_forward.5} parent=19 // pred_region
        %p206 = scmp.lt.s32.totalorder %s17, 1
        %s207 = scalar_select %p206, %s17, 1
        %p208 = scmp.lt.s32.totalorder %s18, 0
        %s209 = scalar_select %p208, %s18, 0
        %s210 = sadd.s32 %s209, %s207
        %s211 = smul.addr %s210, 8
        %s212 = scalar_lea.vmem %s3, %s211
      $region32: #{cross_attention_forward.5} parent=19 // pred_fallthru
        _
    $region20: #{cross_attention_forward.5} parent=5 // pred_fallthru
      _
    %p213 = scmp.le.s32.totalorder 1, %s10
    %p214 = scmp.lt.s32.totalorder %s10, 3
    %p215 = pnand %p213, %p214
    %p216 = pneg %p215
    // Predicated region
    $region33: #{cross_attention_forward.5} parent=5 // pred_check
      _
    $region34: #{cross_attention_forward.5} parent=5 // pred_check_branch
      %218 = sbr.rel (%p215) target = $region36
    $region35: #{cross_attention_forward.5} parent=5 // pred_region
      %s219 = ssub.s32 %s10, 1
      %p220 = scmp.lt.s32.totalorder %s19, 1
      %s221 = scalar_select %p220, %s19, 1
      %p222 = scmp.lt.s32.totalorder %s20, 1
      %s223 = scalar_select %p222, %s20, 1
      %s224 = smul.addr %s221, 2
      %s225 = sadd.s32 %s223, %s224
      %s226 = smul.addr %s225, 4
      %s227 = scalar_lea.vmem %s0, %s226
      %p228 = pneg %p50
      %p229 = pneg %p47
      %s230 = sadd.s32 %s20, 1
      %p231 = scmp.lt.s32.totalorder %s19, 1
      %s232 = scalar_select %p231, %s19, 1
      %p233 = scmp.lt.s32.totalorder %s230, 1
      %s234 = scalar_select %p233, %s230, 1
      %s235 = smul.addr %s232, 2
      %s236 = sadd.s32 %s234, %s235
      %s237 = smul.addr %s236, 4
      %s238 = scalar_lea.vmem %s1, %s237
      %p239 = pneg %p80
      %p240 = pneg %p77
      %p241 = pneg %p101
      %p242 = pneg %p98
      %p243 = scmp.lt.s32.totalorder %s19, 1
      %s244 = scalar_select %p243, %s19, 1
      %p245 = scmp.lt.s32.totalorder %s20, 0
      %s246 = scalar_select %p245, %s20, 0
      %s247 = sadd.s32 %s246, %s244
      %s248 = smul.addr %s247, 8
      %s249 = scalar_lea.vmem %s3, %s248
      %p250 = pneg %p129
      %p251 = pneg %p126
      %p252 = pneg %p157
      %p253 = pneg %p154
      %p254 = scmp.lt.s32.totalorder %s19, 1
      %s255 = scalar_select %p254, %s19, 1
      %p256 = scmp.lt.s32.totalorder %s20, 0
      %s257 = scalar_select %p256, %s20, 0
      %s258 = sadd.s32 %s257, %s255
      %s259 = smul.addr %s258, 8
      %s260 = scalar_lea.vmem %s4, %s259
      %p261 = scmp.lt.s32.totalorder %s19, 1
      %s262 = scalar_select %p261, %s19, 1
      %p263 = scmp.lt.s32.totalorder %s20, 1
      %s264 = scalar_select %p263, %s20, 1
      %s265 = smul.addr %s262, 2
      %s266 = sadd.s32 %s264, %s265
      %s267 = smul.addr %s266, 4
      %s268 = scalar_lea.vmem %s0, %s267
      %s269 = sadd.s32 %s20, 1
      %p270 = scmp.lt.s32.totalorder %s19, 1
      %s271 = scalar_select %p270, %s19, 1
      %p272 = scmp.lt.s32.totalorder %s269, 1
      %s273 = scalar_select %p272, %s269, 1
      %s274 = smul.addr %s271, 2
      %s275 = sadd.s32 %s273, %s274
      %s276 = smul.addr %s275, 4
      %s277 = scalar_lea.vmem %s1, %s276
      %s278 = sadd.s32 %s20, 1
      %p279 = scmp.lt.s32.totalorder %s19, 1
      %s280 = scalar_select %p279, %s19, 1
      %p281 = scmp.lt.s32.totalorder %s20, 0
      %s282 = scalar_select %p281, %s20, 0
      %s283 = sadd.s32 %s282, %s280
      %s284 = smul.addr %s283, 8
      %s285 = scalar_lea.vmem %s3, %s284
      %p286 = scmp.lt.s32.totalorder %s19, 1
      %s287 = scalar_select %p286, %s19, 1
      %p288 = scmp.lt.s32.totalorder %s20, 0
      %s289 = scalar_select %p288, %s20, 0
      %s290 = sadd.s32 %s289, %s287
      %s291 = smul.addr %s290, 8
      %s292 = scalar_lea.vmem %s4, %s291
      %v294 = vld [vmem:[%s268] sm:$0xf]
      %295 = vst [vmem:[#allocation2] sm:$0xf] %v294
      %v296 = vld [vmem:[%s268] sm:$0xf]
      %298 = vrot.lane.b32.xlu0 %v296, 127
      %v299 = vpop.permute.xlu0 %298
      %vm301 = vcmask 1035264
      %302 = vst.msk [vmem:[#allocation2 + $0x4] sm:$0xf] %vm301, %v299
      %v303 = vld [vmem:[%s277] sm:$0xf]
      %305 = vrot.lane.b32.xlu0 %v303, 127
      %v306 = vpop.permute.xlu0 %305
      %vm308 = vcmask 1044472
      %309 = vst.msk [vmem:[#allocation2 + $0x4] sm:$0xf] %vm308, %v306
      %v310 = vld [vmem:[%s268] sm:$0xf]
      %312 = vrot.lane.b32.xlu0 %v310, 126
      %v313 = vpop.permute.xlu0 %312
      %vm315 = vcmask 1027072
      %316 = vst.msk [vmem:[#allocation2 + $0x8] sm:$0xf] %vm315, %v313
      %v317 = vld [vmem:[%s277] sm:$0xf]
      %319 = vrot.lane.b32.xlu0 %v317, 126
      %v320 = vpop.permute.xlu0 %319
      %vm322 = vcmask 1044464
      %323 = vst.msk [vmem:[#allocation2 + $0x8] sm:$0xf] %vm322, %v320
      %v324 = vld [vmem:[%s268] sm:$0xf]
      %326 = vrot.lane.b32.xlu0 %v324, 112
      %v327 = vpop.permute.xlu0 %326
      %vm329 = vcmask 912384
      %330 = vst.msk [vmem:[#allocation2 + $0xc] sm:$0xf] %vm329, %v327
      %v331 = vld [vmem:[%s277] sm:$0xf]
      %333 = vrot.lane.b32.xlu0 %v331, 112
      %v334 = vpop.permute.xlu0 %333
      %vm336 = vcmask 1044352
      %337 = vst.msk [vmem:[#allocation2 + $0xc] sm:$0xf] %vm336, %v334
      %v338 = vld [vmem:[%s268] sm:$0xf]
      %340 = vrot.lane.b32.xlu0 %v338, 111
      %v341 = vpop.permute.xlu0 %340
      %vm343 = vcmask 904192
      %344 = vst.msk [vmem:[#allocation2 + $0x10] sm:$0xf] %vm343, %v341
      %v345 = vld [vmem:[%s277] sm:$0xf]
      %347 = vrot.lane.b32.xlu0 %v345, 111
      %v348 = vpop.permute.xlu0 %347
      %vm350 = vcmask 1044344
      %351 = vst.msk [vmem:[#allocation2 + $0x10] sm:$0xf] %vm350, %v348
      %v352 = vld [vmem:[%s268] sm:$0xf]
      %354 = vrot.lane.b32.xlu0 %v352, 110
      %v355 = vpop.permute.xlu0 %354
      %vm357 = vcmask 896000
      %358 = vst.msk [vmem:[#allocation2 + $0x14] sm:$0xf] %vm357, %v355
      %v359 = vld [vmem:[%s277] sm:$0xf]
      %361 = vrot.lane.b32.xlu0 %v359, 110
      %v362 = vpop.permute.xlu0 %361
      %vm364 = vcmask 1044336
      %365 = vst.msk [vmem:[#allocation2 + $0x14] sm:$0xf] %vm364, %v362
      %v366 = vld [vmem:[%s268] sm:$0xf]
      %368 = vrot.lane.b32.xlu0 %v366, 96
      %v369 = vpop.permute.xlu0 %368
      %vm371 = vcmask 781312
      %372 = vst.msk [vmem:[#allocation2 + $0x18] sm:$0xf] %vm371, %v369
      %v373 = vld [vmem:[%s277] sm:$0xf]
      %375 = vrot.lane.b32.xlu0 %v373, 96
      %v376 = vpop.permute.xlu0 %375
      %vm378 = vcmask 1044224
      %379 = vst.msk [vmem:[#allocation2 + $0x18] sm:$0xf] %vm378, %v376
      %v380 = vld [vmem:[%s268] sm:$0xf]
      %382 = vrot.lane.b32.xlu0 %v380, 95
      %v383 = vpop.permute.xlu0 %382
      %vm385 = vcmask 773120
      %386 = vst.msk [vmem:[#allocation2 + $0x1c] sm:$0xf] %vm385, %v383
      %v387 = vld [vmem:[%s277] sm:$0xf]
      %389 = vrot.lane.b32.xlu0 %v387, 95
      %v390 = vpop.permute.xlu0 %389
      %vm392 = vcmask 1044216
      %393 = vst.msk [vmem:[#allocation2 + $0x1c] sm:$0xf] %vm392, %v390
      %v394 = vld [vmem:[%s268] sm:$0xf]
      %396 = vrot.lane.b32.xlu0 %v394, 94
      %v397 = vpop.permute.xlu0 %396
      %vm399 = vcmask 764928
      %400 = vst.msk [vmem:[#allocation2 + $0x20] sm:$0xf] %vm399, %v397
      %v401 = vld [vmem:[%s277] sm:$0xf]
      %403 = vrot.lane.b32.xlu0 %v401, 94
      %v404 = vpop.permute.xlu0 %403
      %vm406 = vcmask 1044208
      %407 = vst.msk [vmem:[#allocation2 + $0x20] sm:$0xf] %vm406, %v404
      %v408 = vld [vmem:[%s2] sm:$0xf]
      %v409 = vld [vmem:[#allocation2] sm:$0xf]
      %v410 = vld [vmem:[#allocation2 + $0x4] sm:$0xf]
      %v411 = vld [vmem:[#allocation2 + $0x8] sm:$0xf]
      %v412 = vld [vmem:[#allocation2 + $0xc] sm:$0xf]
      %v413 = vld [vmem:[#allocation2 + $0x10] sm:$0xf]
      %v414 = vld [vmem:[#allocation2 + $0x14] sm:$0xf]
      %v415 = vld [vmem:[#allocation2 + $0x18] sm:$0xf]
      %v416 = vld [vmem:[#allocation2 + $0x1c] sm:$0xf]
      %v417 = vld [vmem:[#allocation2 + $0x20] sm:$0xf]
      %v427 = vunpack.c.l.b16 %v409
      %v428 = vunpack.c.l.b16 %v410
      %v429 = vunpack.c.l.b16 %v411
      %v430 = vunpack.c.l.b16 %v412
      %v431 = vunpack.c.l.b16 %v413
      %v432 = vunpack.c.l.b16 %v414
      %v433 = vunpack.c.l.b16 %v415
      %v434 = vunpack.c.l.b16 %v416
      %v435 = vunpack.c.l.b16 %v417
      %v436 = vpack.c.b16 %v428, %v427
      %v437 = vpack.c.b16 %v430, %v429
      %v438 = vpack.c.b16 %v432, %v431
      %v439 = vpack.c.b16 %v434, %v433
      %v440 = vpack.c.b16 %v435, %v435
      %vm445 = vcmask 588800
      %v447 = vsel %vm445, %v408, 0
      %vm449 = vcmask 1043456
      %v451 = vsel %vm449, %v440, 0
      %453 = vmatprep.subr.bf16.mxu0 0
      %454 = vmatpush1.bf16.msra.mxu0 %v436
      %455 = vmatprep.subr.bf16.mxu0 0
      %456 = vmatpush1.bf16.msra.mxu0 %v437
      %457 = vmatprep.subr.bf16.mxu0 0
      %458 = vmatpush1.bf16.msra.mxu0 %v438
      %459 = vmatprep.subr.bf16.mxu0 0
      %460 = vmatpush1.bf16.msra.mxu0 %v439
      %461 = vmatprep.subr.bf16.mxu0 0
      %462 = vmatpush1.bf16.msra.mxu0 %v451
      %463 = vmatprep.subr.bf16.mxu0 0
      %464 = vmatpush1.bf16.msra.mxu0 0
      %465 = vmatprep.subr.bf16.mxu0 0
      %466 = vmatpush1.bf16.msra.mxu0 0
      %467 = vmatprep.subr.bf16.mxu0 0
      %468 = vmatpush1.bf16.msra.mxu0 0
      %469 = vmatprep.subr.bf16.mxu0 0
      %470 = vmatpush1.bf16.msra.mxu0 0
      %471 = vmatprep.subr.bf16.mxu0 0
      %472 = vmatpush1.bf16.msra.mxu0 0
      %473 = vmatprep.subr.bf16.mxu0 0
      %474 = vmatpush1.bf16.msra.mxu0 0
      %475 = vmatprep.subr.bf16.mxu0 0
      %476 = vmatpush1.bf16.msra.mxu0 0
      %477 = vmatprep.subr.bf16.mxu0 0
      %478 = vmatpush1.bf16.msra.mxu0 0
      %479 = vmatprep.subr.bf16.mxu0 0
      %480 = vmatpush1.bf16.msra.mxu0 0
      %481 = vmatprep.subr.bf16.mxu0 0
      %482 = vmatpush1.bf16.msra.mxu0 0
      %483 = vmatprep.subr.bf16.mxu0 0
      %484 = vmatpush1.bf16.msra.mxu0 0
      %485 = vmatprep.mubr.bf16.mxu0 0
      %486 = vmatmul.mubr.bf16.gmra.mrb[0].mxu0 %v447
      %v487 = vpop.f32.mrb[0].mxu0
      %v488 = vadd.f32 0.0, %v487
      %v489 = vpop.f32.mrb[0].mxu0
      %v490 = vpop.f32.mrb[0].mxu0
      %v491 = vpop.f32.mrb[0].mxu0
      %492 = vdwg.mxu0
      %vm493 = vcmp.gt.f32.partialorder %v488, 0.0
      %v494 = vmul.f32 %v488, 0.2
      %v495 = vsel %vm493, %v488, %v494
      %v496 = vld [vmem:[%s285] sm:$0xff]
      %v497 = vadd.f32 %v495, %v496
      %498 = vst [vmem:[%s292] sm:$0xff] %v497
      %p499 = scmp.lt.s32.totalorder %s19, 1
      %s500 = scalar_select %p499, %s19, 1
      %p501 = scmp.lt.s32.totalorder %s20, 0
      %s502 = scalar_select %p501, %s20, 0
      %s503 = sadd.s32 %s502, %s500
      %s504 = smul.addr %s503, 8
      %s505 = scalar_lea.vmem %s4, %s504
      // Predicated region
      $region37: #{cross_attention_forward.5} parent=35 // pred_check
        %p506 = pneg %p154
      $region38: #{cross_attention_forward.5} parent=35 // pred_check_branch
        %508 = sbr.rel (%p506) target = $region40
      $region39: #{cross_attention_forward.5} parent=35 // pred_region
        _
      $region40: #{cross_attention_forward.5} parent=35 // pred_fallthru
        _
    $region36: #{cross_attention_forward.5} parent=5 // pred_fallthru
      _
    %p509 = scmp.le.s32.totalorder 2, %s10
    // Predicated region
    $region41: #{cross_attention_forward.5} parent=5 // pred_check
      %p510 = pneg %p509
    $region42: #{cross_attention_forward.5} parent=5 // pred_check_branch
      %512 = sbr.rel (%p510) target = $region44
    $region43: #{cross_attention_forward.5} parent=5 // pred_region
      %s513 = ssub.s32 %s10, 2
      // Predicated region
      $region45: #{cross_attention_forward.5} parent=43 // pred_check
        %p514 = pneg %p160
      $region46: #{cross_attention_forward.5} parent=43 // pred_check_branch
        %516 = sbr.rel (%p514) target = $region48
      $region47: #{cross_attention_forward.5} parent=43 // pred_region
        %p517 = scmp.lt.s32.totalorder %s21, 1
        %s518 = scalar_select %p517, %s21, 1
        %p519 = scmp.lt.s32.totalorder %s22, 0
        %s520 = scalar_select %p519, %s22, 0
        %s521 = sadd.s32 %s520, %s518
        %s522 = smul.addr %s521, 8
        %s523 = scalar_lea.vmem %s4, %s522
      $region48: #{cross_attention_forward.5} parent=43 // pred_fallthru
        _
    $region44: #{cross_attention_forward.5} parent=5 // pred_fallthru
      _
  $region6: #{cross_attention_forward.5} parent=0 // loop_footer
    %s14 = sadd.s32 1, %s10
  $region7: #{cross_attention_forward.5} parent=0 // loop_footer_branch
    %9 = sbr.rel target = $region3
  $region8: #{cross_attention_forward.5} parent=0 // loop_exit
    _

// kernel: cross_attention_forward.6
$region0: #{cross_attention_forward.6}
  #allocation0 [shape = 'u32[]', space=smem, size = 0x4, offset = 0x4, fixed_abs, tag = 'smem constant byte address 0x4 - core index']
  #allocation1 [shape = 'u32[144,128]{1,0:T(1,128)}', space=vmem, size = 0x12000, scoped, tag = 'internal scratch']
  #allocation2 [shape = 'bf16[72,128]{1,0:T(8,128)(2,1)}', space=vmem, size = 0x4800, scoped, tag = 'scratch operand']
  %s0 = inlined_call_operand.vmem [shape: bf16[2,8,196], index: 0, kind: input, shape index: {}, may-alias: {0,1}]
  %s1 = inlined_call_operand.vmem [shape: bf16[2,8,196], index: 1, kind: input, shape index: {}, may-alias: {0,1}]
  %s2 = inlined_call_operand.vmem [shape: bf16[8,72], index: 2, kind: input, shape index: {}]
  %s3 = inlined_call_operand.vmem [shape: bf16[2,8,128], index: 3, kind: output, shape index: {}]
  %s4 = sld [smem:[#allocation0]]
  $region45: #{cross_attention_forward.6} parent=0
    _
  %s6 = ssub.s32 1, %s4
  %s7 = scalar_select 0, %s6, %s4
  loop: start=0, step=1, limit=4
  $region2: #{cross_attention_forward.6} parent=0 // loop_pre_header
    _
  $region3: #{cross_attention_forward.6} parent=0 // loop_header
    %s9 = sphi 0, %s13
    %p10 = scmp.ge.s32.totalorder %s9, 4
    %s16 = sphi 0, %s28
    %s17 = sphi 0, %s24
    %s18 = sphi 0, %s16
    %s19 = sphi 0, %s17
    %s20 = sphi 0, %s18
    %s21 = sphi 0, %s19
    %s33 = sphi 0, %s35
    %s36 = sphi 0, %s33
    %s37 = sphi 0, %s36
    %s53 = sphi 0, %s37
    %s63 = sphi 0, %s65
    %s66 = sphi 0, %s63
    %s67 = sphi 0, %s66
    %s83 = sphi 0, %s67
    %s87 = sphi 0, %s87
    %s89 = sphi 0, %s87
    %s90 = sphi 0, %s89
    %s104 = sphi 0, %s90
    %s112 = sphi 0, %s114
    %s115 = sphi 0, %s112
    %s116 = sphi 0, %s115
    %s132 = sphi 0, %s116
  $region4: #{cross_attention_forward.6} parent=0 // loop_header_branch
    %12 = sbr.rel (%p10) target = $region8
  $region5: #{cross_attention_forward.6} parent=0 // loop_body
    %s14 = ssub.s32 %s9, 1
    %s15 = ssub.s32 %s9, 2
    %s22 = sadd.s32 1, %s17
    %p23 = scmp.ge.s32.totalorder %s22, 1
    %s24 = scalar_select %p23, 0, %s22
    %s25 = sadd.s32 1, %s16
    %s26 = scalar_select %p23, %s25, %s16
    %p27 = scmp.ge.s32.totalorder %s26, 2
    %s28 = scalar_select %p27, 0, %s26
    %s29 = ssub.s32 %s16, %s28
    %s30 = ssub.s32 %s17, %s24
    %s31 = sor.u32 %s29, %s30
    %p32 = scmp.eq.s32.totalorder %s31, 0
    %s34 = sadd.s32 %s33, 1
    %s35 = scalar_select %p32, %s33, %s34
    %p38 = pneg %p32
    %p39 = scmp.eq.s32.totalorder %s9, 1
    %p40 = por %p38, %p39
    %p41 = scmp.ne.s32.totalorder %s33, %s36
    %p42 = scmp.eq.s32.totalorder %s9, 0
    %p43 = por %p41, %p42
    %p44 = scmp.ne.s32.totalorder %s33, %s36
    %p45 = scmp.eq.s32.totalorder %s14, 1
    %p46 = por %p44, %p45
    %p47 = scmp.ne.s32.totalorder %s36, %s37
    %p48 = scmp.eq.s32.totalorder %s14, 0
    %p49 = por %p47, %p48
    %p50 = scmp.ne.s32.totalorder %s36, %s37
    %p51 = scmp.eq.s32.totalorder %s15, 1
    %p52 = por %p50, %p51
    %p54 = scmp.ne.s32.totalorder %s37, %s53
    %p55 = scmp.eq.s32.totalorder %s15, 0
    %p56 = por %p54, %p55
    %s57 = sadd.s32 %s17, 1
    %s58 = sadd.s32 %s24, 1
    %s59 = ssub.s32 %s16, %s28
    %s60 = ssub.s32 %s57, %s58
    %s61 = sor.u32 %s59, %s60
    %p62 = scmp.eq.s32.totalorder %s61, 0
    %s64 = sadd.s32 %s63, 1
    %s65 = scalar_select %p62, %s63, %s64
    %p68 = pneg %p62
    %p69 = scmp.eq.s32.totalorder %s9, 1
    %p70 = por %p68, %p69
    %p71 = scmp.ne.s32.totalorder %s63, %s66
    %p72 = scmp.eq.s32.totalorder %s9, 0
    %p73 = por %p71, %p72
    %p74 = scmp.ne.s32.totalorder %s63, %s66
    %p75 = scmp.eq.s32.totalorder %s14, 1
    %p76 = por %p74, %p75
    %p77 = scmp.ne.s32.totalorder %s66, %s67
    %p78 = scmp.eq.s32.totalorder %s14, 0
    %p79 = por %p77, %p78
    %p80 = scmp.ne.s32.totalorder %s66, %s67
    %p81 = scmp.eq.s32.totalorder %s15, 1
    %p82 = por %p80, %p81
    %p84 = scmp.ne.s32.totalorder %s67, %s83
    %p85 = scmp.eq.s32.totalorder %s15, 0
    %p86 = por %p84, %p85
    %s88 = sadd.s32 %s87, 1
    %p91 = scmp.eq.s32.totalorder %s9, 1
    %p92 = scmp.ne.s32.totalorder %s87, %s89
    %p93 = scmp.eq.s32.totalorder %s9, 0
    %p94 = por %p92, %p93
    %p95 = scmp.ne.s32.totalorder %s87, %s89
    %p96 = scmp.eq.s32.totalorder %s14, 1
    %p97 = por %p95, %p96
    %p98 = scmp.ne.s32.totalorder %s89, %s90
    %p99 = scmp.eq.s32.totalorder %s14, 0
    %p100 = por %p98, %p99
    %p101 = scmp.ne.s32.totalorder %s89, %s90
    %p102 = scmp.eq.s32.totalorder %s15, 1
    %p103 = por %p101, %p102
    %p105 = scmp.ne.s32.totalorder %s90, %s104
    %p106 = scmp.eq.s32.totalorder %s15, 0
    %p107 = por %p105, %p106
    %s108 = ssub.s32 %s16, %s28
    %s109 = ssub.s32 %s17, %s24
    %s110 = sor.u32 %s108, %s109
    %p111 = scmp.eq.s32.totalorder %s110, 0
    %s113 = sadd.s32 %s112, 1
    %s114 = scalar_select %p111, %s112, %s113
    %p117 = pneg %p111
    %p118 = scmp.eq.s32.totalorder %s9, 1
    %p119 = por %p117, %p118
    %p120 = scmp.ne.s32.totalorder %s112, %s115
    %p121 = scmp.eq.s32.totalorder %s9, 0
    %p122 = por %p120, %p121
    %p123 = scmp.ne.s32.totalorder %s112, %s115
    %p124 = scmp.eq.s32.totalorder %s14, 1
    %p125 = por %p123, %p124
    %p126 = scmp.ne.s32.totalorder %s115, %s116
    %p127 = scmp.eq.s32.totalorder %s14, 0
    %p128 = por %p126, %p127
    %p129 = scmp.ne.s32.totalorder %s115, %s116
    %p130 = scmp.eq.s32.totalorder %s15, 1
    %p131 = por %p129, %p130
    %p133 = scmp.ne.s32.totalorder %s116, %s132
    %p134 = scmp.eq.s32.totalorder %s15, 0
    %p135 = por %p133, %p134
    %p136 = scmp.le.s32.totalorder 1, %s9
    %p137 = scmp.lt.s32.totalorder %s9, 3
    %p138 = pnand %p136, %p137
    %p139 = pneg %p138
    // Predicated region
    $region9: #{cross_attention_forward.6} parent=5 // pred_check
      _
    $region10: #{cross_attention_forward.6} parent=5 // pred_check_branch
      %141 = sbr.rel (%p138) target = $region12
    $region11: #{cross_attention_forward.6} parent=5 // pred_region
      %s142 = ssub.s32 %s9, 1
      // Predicated region
      $region13: #{cross_attention_forward.6} parent=11 // pred_check
        %p143 = pneg %p100
      $region14: #{cross_attention_forward.6} parent=11 // pred_check_branch
        %145 = sbr.rel (%p143) target = $region16
      $region15: #{cross_attention_forward.6} parent=11 // pred_region
        _
      $region16: #{cross_attention_forward.6} parent=11 // pred_fallthru
        _
    $region12: #{cross_attention_forward.6} parent=5 // pred_fallthru
      _
    %p146 = scmp.lt.s32.totalorder %s9, 2
    // Predicated region
    $region17: #{cross_attention_forward.6} parent=5 // pred_check
      %p147 = pneg %p146
    $region18: #{cross_attention_forward.6} parent=5 // pred_check_branch
      %149 = sbr.rel (%p147) target = $region20
    $region19: #{cross_attention_forward.6} parent=5 // pred_region
      // Predicated region
      $region21: #{cross_attention_forward.6} parent=19 // pred_check
        %p150 = pneg %p43
      $region22: #{cross_attention_forward.6} parent=19 // pred_check_branch
        %152 = sbr.rel (%p150) target = $region24
      $region23: #{cross_attention_forward.6} parent=19 // pred_region
        %p153 = scmp.lt.s32.totalorder %s16, 1
        %s154 = scalar_select %p153, %s16, 1
        %p155 = scmp.lt.s32.totalorder %s17, 1
        %s156 = scalar_select %p155, %s17, 1
        %s157 = smul.addr %s154, 2
        %s158 = sadd.s32 %s156, %s157
        %s159 = smul.addr %s158, 4
        %s160 = scalar_lea.vmem %s0, %s159
      $region24: #{cross_attention_forward.6} parent=19 // pred_fallthru
        _
      // Predicated region
      $region25: #{cross_attention_forward.6} parent=19 // pred_check
        %p161 = pneg %p73
      $region26: #{cross_attention_forward.6} parent=19 // pred_check_branch
        %163 = sbr.rel (%p161) target = $region28
      $region27: #{cross_attention_forward.6} parent=19 // pred_region
        %s164 = sadd.s32 %s17, 1
        %p165 = scmp.lt.s32.totalorder %s16, 1
        %s166 = scalar_select %p165, %s16, 1
        %p167 = scmp.lt.s32.totalorder %s164, 1
        %s168 = scalar_select %p167, %s164, 1
        %s169 = smul.addr %s166, 2
        %s170 = sadd.s32 %s168, %s169
        %s171 = smul.addr %s170, 4
        %s172 = scalar_lea.vmem %s1, %s171
        %s173 = sadd.s32 %s17, 1
      $region28: #{cross_attention_forward.6} parent=19 // pred_fallthru
        _
    $region20: #{cross_attention_forward.6} parent=5 // pred_fallthru
      _
    %p174 = scmp.le.s32.totalorder 1, %s9
    %p175 = scmp.lt.s32.totalorder %s9, 3
    %p176 = pnand %p174, %p175
    %p177 = pneg %p176
    // Predicated region
    $region29: #{cross_attention_forward.6} parent=5 // pred_check
      _
    $region30: #{cross_attention_forward.6} parent=5 // pred_check_branch
      %179 = sbr.rel (%p176) target = $region32
    $region31: #{cross_attention_forward.6} parent=5 // pred_region
      %s180 = ssub.s32 %s9, 1
      %p181 = scmp.lt.s32.totalorder %s18, 1
      %s182 = scalar_select %p181, %s18, 1
      %p183 = scmp.lt.s32.totalorder %s19, 1
      %s184 = scalar_select %p183, %s19, 1
      %s185 = smul.addr %s182, 2
      %s186 = sadd.s32 %s184, %s185
      %s187 = smul.addr %s186, 4
      %s188 = scalar_lea.vmem %s0, %s187
      %p189 = pneg %p49
      %p190 = pneg %p46
      %s191 = sadd.s32 %s19, 1
      %p192 = scmp.lt.s32.totalorder %s18, 1
      %s193 = scalar_select %p192, %s18, 1
      %p194 = scmp.lt.s32.totalorder %s191, 1
      %s195 = scalar_select %p194, %s191, 1
      %s196 = smul.addr %s193, 2
      %s197 = sadd.s32 %s195, %s196
      %s198 = smul.addr %s197, 4
      %s199 = scalar_lea.vmem %s1, %s198
      %p200 = pneg %p79
      %p201 = pneg %p76
      %p202 = pneg %p100
      %p203 = pneg %p97
      %p204 = pneg %p128
      %p205 = pneg %p125
      %p206 = scmp.lt.s32.totalorder %s18, 1
      %s207 = scalar_select %p206, %s18, 1
      %p208 = scmp.lt.s32.totalorder %s19, 0
      %s209 = scalar_select %p208, %s19, 0
      %s210 = sadd.s32 %s209, %s207
      %s211 = smul.addr %s210, 4
      %s212 = scalar_lea.vmem %s3, %s211
      %p213 = scmp.lt.s32.totalorder %s18, 1
      %s214 = scalar_select %p213, %s18, 1
      %p215 = scmp.lt.s32.totalorder %s19, 1
      %s216 = scalar_select %p215, %s19, 1
      %s217 = smul.addr %s214, 2
      %s218 = sadd.s32 %s216, %s217
      %s219 = smul.addr %s218, 4
      %s220 = scalar_lea.vmem %s0, %s219
      %s221 = sadd.s32 %s19, 1
      %p222 = scmp.lt.s32.totalorder %s18, 1
      %s223 = scalar_select %p222, %s18, 1
      %p224 = scmp.lt.s32.totalorder %s221, 1
      %s225 = scalar_select %p224, %s221, 1
      %s226 = smul.addr %s223, 2
      %s227 = sadd.s32 %s225, %s226
      %s228 = smul.addr %s227, 4
      %s229 = scalar_lea.vmem %s1, %s228
      %s230 = sadd.s32 %s19, 1
      %p231 = scmp.lt.s32.totalorder %s18, 1
      %s232 = scalar_select %p231, %s18, 1
      %p233 = scmp.lt.s32.totalorder %s19, 0
      %s234 = scalar_select %p233, %s19, 0
      %s235 = sadd.s32 %s234, %s232
      %s236 = smul.addr %s235, 4
      %s237 = scalar_lea.vmem %s3, %s236
      %v239 = vld [vmem:[%s220] sm:$0xf]
      %240 = vst [vmem:[#allocation2] sm:$0xf] %v239
      %v241 = vld [vmem:[%s220] sm:$0xf]
      %243 = vrot.lane.b32.xlu0 %v241, 126
      %v244 = vpop.permute.xlu0 %243
      %vm246 = vcmask 1027072
      %247 = vst.msk [vmem:[#allocation2 + $0x4] sm:$0xf] %vm246, %v244
      %v248 = vld [vmem:[%s229] sm:$0xf]
      %250 = vrot.lane.b32.xlu0 %v248, 126
      %v251 = vpop.permute.xlu0 %250
      %vm253 = vcmask 1044464
      %254 = vst.msk [vmem:[#allocation2 + $0x4] sm:$0xf] %vm253, %v251
      %v255 = vld [vmem:[%s220] sm:$0xf]
      %257 = vrot.lane.b32.xlu0 %v255, 124
      %v258 = vpop.permute.xlu0 %257
      %vm260 = vcmask 1010688
      %261 = vst.msk [vmem:[#allocation2 + $0x8] sm:$0xf] %vm260, %v258
      %v262 = vld [vmem:[%s229] sm:$0xf]
      %264 = vrot.lane.b32.xlu0 %v262, 124
      %v265 = vpop.permute.xlu0 %264
      %vm267 = vcmask 1044448
      %268 = vst.msk [vmem:[#allocation2 + $0x8] sm:$0xf] %vm267, %v265
      %v269 = vld [vmem:[%s220] sm:$0xf]
      %271 = vrot.lane.b32.xlu0 %v269, 96
      %v272 = vpop.permute.xlu0 %271
      %vm274 = vcmask 781312
      %275 = vst.msk [vmem:[#allocation2 + $0xc] sm:$0xf] %vm274, %v272
      %v276 = vld [vmem:[%s229] sm:$0xf]
      %278 = vrot.lane.b32.xlu0 %v276, 96
      %v279 = vpop.permute.xlu0 %278
      %vm281 = vcmask 1044224
      %282 = vst.msk [vmem:[#allocation2 + $0xc] sm:$0xf] %vm281, %v279
      %v283 = vld [vmem:[%s220] sm:$0xf]
      %285 = vrot.lane.b32.xlu0 %v283, 94
      %v286 = vpop.permute.xlu0 %285
      %vm288 = vcmask 764928
      %289 = vst.msk [vmem:[#allocation2 + $0x10] sm:$0xf] %vm288, %v286
      %v290 = vld [vmem:[%s229] sm:$0xf]
      %292 = vrot.lane.b32.xlu0 %v290, 94
      %v293 = vpop.permute.xlu0 %292
      %vm295 = vcmask 1044208
      %296 = vst.msk [vmem:[#allocation2 + $0x10] sm:$0xf] %vm295, %v293
      %v297 = vld [vmem:[%s220] sm:$0xf]
      %299 = vrot.lane.b32.xlu0 %v297, 92
      %v300 = vpop.permute.xlu0 %299
      %vm302 = vcmask 748544
      %303 = vst.msk [vmem:[#allocation2 + $0x14] sm:$0xf] %vm302, %v300
      %v304 = vld [vmem:[%s229] sm:$0xf]
      %306 = vrot.lane.b32.xlu0 %v304, 92
      %v307 = vpop.permute.xlu0 %306
      %vm309 = vcmask 1044192
      %310 = vst.msk [vmem:[#allocation2 + $0x14] sm:$0xf] %vm309, %v307
      %v311 = vld [vmem:[%s220] sm:$0xf]
      %313 = vrot.lane.b32.xlu0 %v311, 64
      %v314 = vpop.permute.xlu0 %313
      %vm316 = vcmask 519168
      %317 = vst.msk [vmem:[#allocation2 + $0x18] sm:$0xf] %vm316, %v314
      %v318 = vld [vmem:[%s229] sm:$0xf]
      %320 = vrot.lane.b32.xlu0 %v318, 64
      %v321 = vpop.permute.xlu0 %320
      %vm323 = vcmask 1043968
      %324 = vst.msk [vmem:[#allocation2 + $0x18] sm:$0xf] %vm323, %v321
      %v325 = vld [vmem:[%s220] sm:$0xf]
      %327 = vrot.lane.b32.xlu0 %v325, 62
      %v328 = vpop.permute.xlu0 %327
      %vm330 = vcmask 502784
      %331 = vst.msk [vmem:[#allocation2 + $0x1c] sm:$0xf] %vm330, %v328
      %v332 = vld [vmem:[%s229] sm:$0xf]
      %334 = vrot.lane.b32.xlu0 %v332, 62
      %v335 = vpop.permute.xlu0 %334
      %vm337 = vcmask 1043952
      %338 = vst.msk [vmem:[#allocation2 + $0x1c] sm:$0xf] %vm337, %v335
      %v339 = vld [vmem:[%s220] sm:$0xf]
      %341 = vrot.lane.b32.xlu0 %v339, 60
      %v342 = vpop.permute.xlu0 %341
      %vm344 = vcmask 486400
      %345 = vst.msk [vmem:[#allocation2 + $0x20] sm:$0xf] %vm344, %v342
      %v346 = vld [vmem:[%s229] sm:$0xf]
      %348 = vrot.lane.b32.xlu0 %v346, 60
      %v349 = vpop.permute.xlu0 %348
      %vm351 = vcmask 1043936
      %352 = vst.msk [vmem:[#allocation2 + $0x20] sm:$0xf] %vm351, %v349
      %v353 = vld [vmem:[%s2] sm:$0xf]
      %v354 = vld [vmem:[#allocation2] sm:$0xf]
      %v355 = vld [vmem:[#allocation2 + $0x4] sm:$0xf]
      %v356 = vld [vmem:[#allocation2 + $0x8] sm:$0xf]
      %v357 = vld [vmem:[#allocation2 + $0xc] sm:$0xf]
      %v358 = vld [vmem:[#allocation2 + $0x10] sm:$0xf]
      %v359 = vld [vmem:[#allocation2 + $0x14] sm:$0xf]
      %v360 = vld [vmem:[#allocation2 + $0x18] sm:$0xf]
      %v361 = vld [vmem:[#allocation2 + $0x1c] sm:$0xf]
      %v362 = vld [vmem:[#allocation2 + $0x20] sm:$0xf]
      %v372 = vunpack.c.l.b16 %v354
      %v373 = vunpack.c.l.b16 %v355
      %v374 = vunpack.c.l.b16 %v356
      %v375 = vunpack.c.l.b16 %v357
      %v376 = vunpack.c.l.b16 %v358
      %v377 = vunpack.c.l.b16 %v359
      %v378 = vunpack.c.l.b16 %v360
      %v379 = vunpack.c.l.b16 %v361
      %v380 = vunpack.c.l.b16 %v362
      %v381 = vpack.c.b16 %v373, %v372
      %v382 = vpack.c.b16 %v375, %v374
      %v383 = vpack.c.b16 %v377, %v376
      %v384 = vpack.c.b16 %v379, %v378
      %v385 = vpack.c.b16 %v380, %v380
      %vm390 = vcmask 588800
      %v392 = vsel %vm390, %v353, 0
      %vm394 = vcmask 1043456
      %v396 = vsel %vm394, %v385, 0
      %398 = vmatprep.subr.bf16.mxu0 0
      %399 = vmatpush1.bf16.msra.mxu0 %v381
      %400 = vmatprep.subr.bf16.mxu0 0
      %401 = vmatpush1.bf16.msra.mxu0 %v382
      %402 = vmatprep.subr.bf16.mxu0 0
      %403 = vmatpush1.bf16.msra.mxu0 %v383
      %404 = vmatprep.subr.bf16.mxu0 0
      %405 = vmatpush1.bf16.msra.mxu0 %v384
      %406 = vmatprep.subr.bf16.mxu0 0
      %407 = vmatpush1.bf16.msra.mxu0 %v396
      %408 = vmatprep.subr.bf16.mxu0 0
      %409 = vmatpush1.bf16.msra.mxu0 0
      %410 = vmatprep.subr.bf16.mxu0 0
      %411 = vmatpush1.bf16.msra.mxu0 0
      %412 = vmatprep.subr.bf16.mxu0 0
      %413 = vmatpush1.bf16.msra.mxu0 0
      %414 = vmatprep.subr.bf16.mxu0 0
      %415 = vmatpush1.bf16.msra.mxu0 0
      %416 = vmatprep.subr.bf16.mxu0 0
      %417 = vmatpush1.bf16.msra.mxu0 0
      %418 = vmatprep.subr.bf16.mxu0 0
      %419 = vmatpush1.bf16.msra.mxu0 0
      %420 = vmatprep.subr.bf16.mxu0 0
      %421 = vmatpush1.bf16.msra.mxu0 0
      %422 = vmatprep.subr.bf16.mxu0 0
      %423 = vmatpush1.bf16.msra.mxu0 0
      %424 = vmatprep.subr.bf16.mxu0 0
      %425 = vmatpush1.bf16.msra.mxu0 0
      %426 = vmatprep.subr.bf16.mxu0 0
      %427 = vmatpush1.bf16.msra.mxu0 0
      %428 = vmatprep.subr.bf16.mxu0 0
      %429 = vmatpush1.bf16.msra.mxu0 0
      %430 = vmatprep.mubr.bf16.mxu0 0
      %431 = vmatmul.mubr.bf16.gmra.mrb[0].mxu0 %v392
      %v432 = vpop.f32.mrb[0].mxu0
      %v433 = vadd.f32 0.0, %v432
      %v434 = vpop.f32.mrb[0].mxu0
      %v435 = vpop.f32.mrb[0].mxu0
      %v436 = vpop.f32.mrb[0].mxu0
      %437 = vdwg.mxu0
      %vm438 = vcmp.gt.f32.partialorder %v433, 0.0
      %v439 = vmul.f32 %v433, 0.2
      %v440 = vsel %vm438, %v433, %v439
      %v441 = vpack.c.bf16 %v440, %v440
      %442 = vst [vmem:[%s237] sm:$0xf] %v441
      %p443 = scmp.lt.s32.totalorder %s18, 1
      %s444 = scalar_select %p443, %s18, 1
      %p445 = scmp.lt.s32.totalorder %s19, 0
      %s446 = scalar_select %p445, %s19, 0
      %s447 = sadd.s32 %s446, %s444
      %s448 = smul.addr %s447, 4
      %s449 = scalar_lea.vmem %s3, %s448
      // Predicated region
      $region33: #{cross_attention_forward.6} parent=31 // pred_check
        %p450 = pneg %p125
      $region34: #{cross_attention_forward.6} parent=31 // pred_check_branch
        %452 = sbr.rel (%p450) target = $region36
      $region35: #{cross_attention_forward.6} parent=31 // pred_region
        _
      $region36: #{cross_attention_forward.6} parent=31 // pred_fallthru
        _
    $region32: #{cross_attention_forward.6} parent=5 // pred_fallthru
      _
    %p453 = scmp.le.s32.totalorder 2, %s9
    // Predicated region
    $region37: #{cross_attention_forward.6} parent=5 // pred_check
      %p454 = pneg %p453
    $region38: #{cross_attention_forward.6} parent=5 // pred_check_branch
      %456 = sbr.rel (%p454) target = $region40
    $region39: #{cross_attention_forward.6} parent=5 // pred_region
      %s457 = ssub.s32 %s9, 2
      // Predicated region
      $region41: #{cross_attention_forward.6} parent=39 // pred_check
        %p458 = pneg %p131
      $region42: #{cross_attention_forward.6} parent=39 // pred_check_branch
        %460 = sbr.rel (%p458) target = $region44
      $region43: #{cross_attention_forward.6} parent=39 // pred_region
        %p461 = scmp.lt.s32.totalorder %s20, 1
        %s462 = scalar_select %p461, %s20, 1
        %p463 = scmp.lt.s32.totalorder %s21, 0
        %s464 = scalar_select %p463, %s21, 0
        %s465 = sadd.s32 %s464, %s462
        %s466 = smul.addr %s465, 4
        %s467 = scalar_lea.vmem %s3, %s466
      $region44: #{cross_attention_forward.6} parent=39 // pred_fallthru
        _
    $region40: #{cross_attention_forward.6} parent=5 // pred_fallthru
      _
  $region6: #{cross_attention_forward.6} parent=0 // loop_footer
    %s13 = sadd.s32 1, %s9
  $region7: #{cross_attention_forward.6} parent=0 // loop_footer_branch
    %8 = sbr.rel target = $region3
  $region8: #{cross_attention_forward.6} parent=0 // loop_exit
    _

</llo_original>
